<compile_context>
chip_gen: v7x
topology: tpu7x:2x2x1
jax: 0.10.0
libtpu: 0.0.40
codegen_flags: <defaults>
</compile_context>

<pallas_src>
import functools

import jax
import jax.numpy as jnp
from jax.experimental import pallas as pl
from jax.experimental.pallas import tpu as pltpu

EPS = 1e-3  # BatchNorm2d eps from the module


def _round_up(v, m):
    return (v + m - 1) // m * m


def _ceil_div(a, b):
    return -(-a // b)


def _convt_phase_kernel(xcols_ref, w_ref, y_ref, s1_ref, s2_ref, acc_ref):
    """One (phase, M-tile, K-tile) grid step.

    xcols_ref: (tile_m, tile_k)  bf16  merged-tap input columns (this phase / M / K tile)
    w_ref:     (tile_k, Cpad)    bf16  merged-tap weights (this phase / K tile)
    y_ref:     (tile_m, Cpad)    bf16  pre-BN conv output tile (written on last K step)
    s1_ref:    (1, Cpad)         f32   per-(phase, M-tile) sum
    s2_ref:    (1, Cpad)         f32   per-(phase, M-tile) sum of squares
    acc_ref:   (tile_m, Cpad)    f32   VMEM accumulator across the K axis
    """
    k = pl.program_id(2)

    @pl.when(k == 0)
    def _init():
        acc_ref[...] = jnp.zeros_like(acc_ref)

    acc_ref[...] += jnp.dot(xcols_ref[...], w_ref[...],
                            preferred_element_type=jnp.float32)

    @pl.when(k == pl.num_programs(2) - 1)
    def _finalize():
        acc = acc_ref[...]
        y_ref[...] = acc.astype(y_ref.dtype)   # bf16 store: halves the HBM writeback
        s1_ref[...] = jnp.sum(acc, axis=0, keepdims=True)
        s2_ref[...] = jnp.sum(acc * acc, axis=0, keepdims=True)


@functools.partial(jax.jit, static_argnames=("stride", "padding", "tile_m_max",
                                             "tile_k_max", "compute_dtype"))
def conv_transpose2d_block(x, weight, gamma, beta, *, stride, padding,
                           tile_m_max=512, tile_k_max=2048,
                           compute_dtype=jnp.bfloat16):
    """x: (N, Cin, H, W) NCHW. weight: (Cin, Cout, KH, KW) (PyTorch ConvTranspose2d)."""
    N, Cin, H, W = x.shape
    _, Cout, KH, KW = weight.shape
    s, p = stride, padding
    OH = (H - 1) * s - 2 * p + KH
    OW = (W - 1) * s - 2 * p + KW
    assert OH > 0 and OW > 0
    # TODO(synk): phases with unequal row counts (OH or OW not divisible by stride) would
    # need per-phase row counts in the BN fold; not needed for AttGAN configs (4, 2, 1).
    assert OH % s == 0 and OW % s == 0, "kernel assumes stride divides the output size"
    OHr, OWr = OH // s, OW // s
    P = s * s
    pe_h, pe_w = KH - 1 - p, KW - 1 - p

    # ---- stride-phase decomposition: only the taps that actually hit each parity phase.
    taps_per_phase = []
    for rh in range(s):
        for rw in range(s):
            taps = []
            for kh in range(KH):
                if (rh + kh - pe_h) % s:
                    continue
                dh = (rh + kh - pe_h) // s
                for kw in range(KW):
                    if (rw + kw - pe_w) % s:
                        continue
                    dw = (rw + kw - pe_w) // s
                    taps.append((kh, kw, dh, dw))
            taps_per_phase.append(taps)
    T = max(len(t) for t in taps_per_phase)
    Kc = T * Cin

    all_dh = [dh for taps in taps_per_phase for (_, _, dh, _) in taps]
    all_dw = [dw for taps in taps_per_phase for (_, _, _, dw) in taps]
    pad_t = max(0, -min(all_dh))
    pad_b = max(0, OHr - 1 + max(all_dh) - (H - 1))
    pad_l = max(0, -min(all_dw))
    pad_r = max(0, OWr - 1 + max(all_dw) - (W - 1))

    # bf16 at the source: every slice / concat / pad below moves half the bytes.
    x_nhwc = jnp.transpose(x.astype(compute_dtype), (0, 2, 3, 1))
    xpad = jnp.pad(x_nhwc, ((0, 0), (pad_t, pad_b), (pad_l, pad_r), (0, 0)))
    weight_c = weight.astype(compute_dtype)

    # ---- tiling: balanced M tiles (bf16 16-sublane granular) and a K grid axis so the
    # double-buffered working set stays well under v7x's 64 MiB per-TC VMEM.
    M_ph = N * OHr * OWr                                 # rows per phase
    n_tiles = _ceil_div(M_ph, tile_m_max)
    tile_m = _round_up(_ceil_div(M_ph, n_tiles), 16)
    M_pad = tile_m * n_tiles
    n_k = _ceil_div(Kc, tile_k_max)
    k_gran = 16 if n_k == 1 else 128                     # 128-lane dense K tiles if split
    tile_k = _round_up(_ceil_div(Kc, n_k), k_gran)
    Kc_pad = tile_k * n_k
    Cpad = _round_up(Cout, 128)                          # lane-dense MXU output / stores

    # ---- merged-tap columns (P, M_pad, Kc_pad) bf16, per-phase weights (P, Kc_pad, Cpad).
    xcols_phases, wmat_phases = [], []
    for taps in taps_per_phase:
        cols, wblk = [], []
        for t in range(T):
            if t < len(taps):
                kh, kw, dh, dw = taps[t]
                cols.append(xpad[:, dh + pad_t: dh + pad_t + OHr,
                                 dw + pad_l: dw + pad_l + OWr, :])
                wblk.append(weight_c[:, :, KH - 1 - kh, KW - 1 - kw])  # spatially flipped
            else:  # dummy tap (only when stride does not divide kernel size)
                cols.append(jnp.zeros((N, OHr, OWr, Cin), compute_dtype))
                wblk.append(jnp.zeros((Cin, Cout), compute_dtype))
        xcols_phases.append(jnp.concatenate(cols, axis=-1).reshape(M_ph, Kc))
        wmat_phases.append(jnp.concatenate(wblk, axis=0))
    xcols = jnp.stack(xcols_phases, axis=0)
    xcols = jnp.pad(xcols, ((0, 0), (0, M_pad - M_ph), (0, Kc_pad - Kc)))
    wmat = jnp.stack(wmat_phases, axis=0)
    wmat = jnp.pad(wmat, ((0, 0), (0, Kc_pad - Kc), (0, Cpad - Cout)))

    # VMEM limit: generous but capped at 3/4 of physical (v7x: 64 MiB per TensorCore).
    try:
        vmem_cap = int(pltpu.get_tpu_info().vmem_capacity_bytes)
    except Exception:
        vmem_cap = 128 * 1024 * 1024
    vmem_limit = min(64 * 1024 * 1024, vmem_cap * 3 // 4)

    # ---- pass 1 (Pallas): per-phase conv matmul + per-(phase, M-tile) BN partial sums.
    itemsize = jnp.dtype(compute_dtype).itemsize
    flops = 2 * P * M_pad * Kc_pad * Cpad
    bytes_accessed = (xcols.size * itemsize + wmat.size * itemsize * n_tiles
                      + P * M_pad * Cpad * itemsize          # bf16 y_conv store
                      + P * n_tiles * 2 * Cpad * 4)          # stats
    y_conv, s1, s2 = pl.pallas_call(
        _convt_phase_kernel,
        grid=(P, n_tiles, n_k),
        in_specs=[
            pl.BlockSpec((None, tile_m, tile_k), lambda ph, m, k: (ph, m, k)),
            pl.BlockSpec((None, tile_k, Cpad), lambda ph, m, k: (ph, k, 0)),
        ],
        out_specs=(
            pl.BlockSpec((None, tile_m, Cpad), lambda ph, m, k: (ph, m, 0)),
            pl.BlockSpec((None, None, 1, Cpad), lambda ph, m, k: (ph, m, 0, 0)),
            pl.BlockSpec((None, None, 1, Cpad), lambda ph, m, k: (ph, m, 0, 0)),
        ),
        out_shape=(
            jax.ShapeDtypeStruct((P, M_pad, Cpad), compute_dtype),
            jax.ShapeDtypeStruct((P, n_tiles, 1, Cpad), jnp.float32),
            jax.ShapeDtypeStruct((P, n_tiles, 1, Cpad), jnp.float32),
        ),
        scratch_shapes=[pltpu.VMEM((tile_m, Cpad), jnp.float32)],
        compiler_params=pltpu.CompilerParams(
            dimension_semantics=("parallel", "parallel", "arbitrary"),
            vmem_limit_bytes=vmem_limit),
        cost_estimate=pl.CostEstimate(flops=flops, transcendentals=0,
                                      bytes_accessed=bytes_accessed),
    )(xcols, wmat)

    # ---- BN fold (tiny, per-channel, f32): per-tile M2 + between-tile term avoids the
    # global E[x^2] - E[x]^2 cancellation when |mean| >> std. Padded rows contribute zeros
    # to the sums and are excluded from the per-tile counts.
    s1c = s1[..., :Cout]                                    # (P, n_tiles, 1, Cout) f32
    s2c = s2[..., :Cout]
    cnt = jnp.clip(M_ph - jnp.arange(n_tiles) * tile_m, 0, tile_m).astype(jnp.float32)
    cnt = cnt.reshape(1, n_tiles, 1, 1)
    count = jnp.float32(N * OH * OW)                        # == P * M_ph
    mean_t = s1c / jnp.maximum(cnt, 1.0)
    m2_t = jnp.maximum(s2c - cnt * mean_t * mean_t, 0.0)    # within-tile sum sq deviation
    mean = jnp.sum(s1c, axis=(0, 1, 2)) / count             # (Cout,)
    var = (jnp.sum(m2_t, axis=(0, 1, 2))
           + jnp.sum(cnt * (mean_t - mean) ** 2, axis=(0, 1, 2))) / count
    rstd = jax.lax.rsqrt(jnp.maximum(var, 0.0) + EPS)       # biased variance (BN training)
    scale = gamma.astype(jnp.float32) * rstd                # (Cout,)
    shift = beta.astype(jnp.float32) - mean * scale

    # ---- BN apply + ReLU, fused by XLA into the phase de-interleave back to NCHW.
    y = y_conv[:, :M_ph, :Cout].astype(jnp.float32)         # (P, M_ph, Cout)
    y = jnp.maximum(y * scale + shift, 0.0)
    y = y.reshape(s, s, N, OHr, OWr, Cout)
    y = jnp.transpose(y, (2, 3, 0, 4, 1, 5)).reshape(N, OH, OW, Cout)
    return jnp.transpose(y, (0, 3, 1, 2))


def reference(x, weight, gamma, beta, *, stride, padding):
    """Pure-JAX/XLA f32 reference for the same forward pass."""
    Cin, Cout, KH, KW = weight.shape
    w_oihw = jnp.transpose(weight, (1, 0, 2, 3))[:, :, ::-1, ::-1]
    pe = KH - 1 - padding
    y = jax.lax.conv_general_dilated(
        x, w_oihw, window_strides=(1, 1),
        padding=[(pe, pe), (pe, pe)],
        lhs_dilation=(stride, stride),
        dimension_numbers=("NCHW", "OIHW", "NCHW"),
        precision=jax.lax.Precision.HIGHEST)
    mean = y.mean(axis=(0, 2, 3), keepdims=True)
    var = ((y - mean) ** 2).mean(axis=(0, 2, 3), keepdims=True)
    yn = (y - mean) * jax.lax.rsqrt(var + EPS)
    yn = yn * gamma.reshape(1, -1, 1, 1) + beta.reshape(1, -1, 1, 1)
    return jnp.maximum(yn, 0.0)


if __name__ == "__main__":
    # AttGAN decoder-style block: kernel_size=4, stride=2, padding=1
    N, Cin, H, W = 2, 4, 16, 16
    Cout, K, S, P_ = 8, 4, 2, 1

    key = jax.random.PRNGKey(0)
    kx, kw = jax.random.split(key)
    x = jax.random.normal(kx, (N, Cin, H, W), dtype=jnp.float32)
    # ConvTranspose2d weight: (in_channels, out_channels, kH, kW), bias=False
    weight = 0.1 * jax.random.normal(kw, (Cin, Cout, K, K), dtype=jnp.float32)
    # BatchNorm2d default init: weight (gamma) = 1, bias (beta) = 0
    gamma = jnp.ones((Cout,), dtype=jnp.float32)
    beta = jnp.zeros((Cout,), dtype=jnp.float32)

    out = conv_transpose2d_block(x, weight, gamma, beta, stride=S, padding=P_)
    out = jax.block_until_ready(out)

    ref = jax.block_until_ready(reference(x, weight, gamma, beta, stride=S, padding=P_))
    OH = (H - 1) * S - 2 * P_ + K
    OW = (W - 1) * S - 2 * P_ + K
    assert out.shape == (N, Cout, OH, OW)
    # Intentional precision choice: bf16 MXU operands AND a bf16 pre-BN intermediate
    # (f32 accumulation / f32 BN statistics) vs an f32-HIGHEST reference.
    assert jnp.allclose(out, ref, atol=3e-2, rtol=3e-2), "mismatch vs reference"

    print("KERNEL_OK")
</pallas_src>

<mosaic_0001>
module attributes {stable_mosaic.version = 11 : i64} {
  func.func @_convt_phase_kernel(%arg0: i32, %arg1: i32, %arg2: i32, %arg3: memref<1x512x16xbf16, #tpu.memory_space<vmem>>, %arg4: memref<1x16x128xbf16, #tpu.memory_space<vmem>>, %arg5: memref<1x512x128xbf16, #tpu.memory_space<vmem>>, %arg6: memref<1x1x1x128xf32, #tpu.memory_space<vmem>>, %arg7: memref<1x1x1x128xf32, #tpu.memory_space<vmem>>, %arg8: memref<512x128xf32, #tpu.memory_space<vmem>>) attributes {dimension_semantics = [#tpu.dimension_semantics<parallel>, #tpu.dimension_semantics<parallel>, #tpu.dimension_semantics<arbitrary>], iteration_bounds = array<i64: 4, 1, 1>, scalar_prefetch = 0 : i64, scratch_operands = 1 : i64, tpu.core_type = #tpu.core_type<tc>, window_params = [{transform_indices = @transform_0, window_bounds = array<i64: 1, 512, 16>}, {transform_indices = @transform_1, window_bounds = array<i64: 1, 16, 128>}, {transform_indices = @transform_2, window_bounds = array<i64: 1, 512, 128>}, {transform_indices = @transform_3, window_bounds = array<i64: 1, 1, 1, 128>}, {transform_indices = @transform_4, window_bounds = array<i64: 1, 1, 1, 128>}]} {
    %c0_i32 = arith.constant 0 : i32
    %0 = arith.cmpi eq, %arg2, %c0_i32 : i32
    %1 = arith.extui %0 : i1 to i32
    %c0_i32_0 = arith.constant 0 : i32
    %2 = arith.cmpi ne, %1, %c0_i32_0 : i32
    scf.if %2 {
      %cst_12 = arith.constant 0.000000e+00 : f32
      %14 = vector.broadcast %cst_12 : f32 to vector<512x128xf32>
      %c0_13 = arith.constant 0 : index
      %c0_14 = arith.constant 0 : index
      %15 = vector.load %arg8[%c0_13, %c0_14] : memref<512x128xf32, #tpu.memory_space<vmem>>, vector<512x128xf32>
      tpu.vector_store %arg8[%c0_13, %c0_14], %14 {strides = array<i32>} : memref<512x128xf32, #tpu.memory_space<vmem>>, vector<512x128xf32>,
    } else {
    }
    %c0 = arith.constant 0 : index
    %c0_1 = arith.constant 0 : index
    %3 = vector.load %arg8[%c0, %c0_1] : memref<512x128xf32, #tpu.memory_space<vmem>>, vector<512x128xf32>
    %c0_2 = arith.constant 0 : index
    %c0_3 = arith.constant 0 : index
    %c0_4 = arith.constant 0 : index
    %4 = vector.load %arg3[%c0_2, %c0_3, %c0_4] : memref<1x512x16xbf16, #tpu.memory_space<vmem>>, vector<1x512x16xbf16>
    %5 = vector.shape_cast %4 : vector<1x512x16xbf16> to vector<512x16xbf16>
    %c0_5 = arith.constant 0 : index
    %c0_6 = arith.constant 0 : index
    %c0_7 = arith.constant 0 : index
    %6 = vector.load %arg4[%c0_5, %c0_6, %c0_7] : memref<1x16x128xbf16, #tpu.memory_space<vmem>>, vector<1x16x128xbf16>
    %7 = vector.shape_cast %6 : vector<1x16x128xbf16> to vector<16x128xbf16>
    %cst = arith.constant dense<0.000000e+00> : vector<512x128xf32>
    %8 = tpu.matmul %5, %7, %cst {dimension_numbers = #tpu.dot_dimension_numbers<[1], [0], [0], [1], [0, 0, 1, 1], [], []>} : vector<512x16xbf16>, vector<16x128xbf16>, vector<512x128xf32> -> vector<512x128xf32>
    %9 = arith.addf %3, %8 : vector<512x128xf32>
    %c0_8 = arith.constant 0 : index
    %c0_9 = arith.constant 0 : index
    %10 = vector.load %arg8[%c0_8, %c0_9] : memref<512x128xf32, #tpu.memory_space<vmem>>, vector<512x128xf32>
    tpu.vector_store %arg8[%c0_8, %c0_9], %9 {strides = array<i32>} : memref<512x128xf32, #tpu.memory_space<vmem>>, vector<512x128xf32>,
    %c0_i32_10 = arith.constant 0 : i32
    %11 = arith.cmpi eq, %arg2, %c0_i32_10 : i32
    %12 = arith.extui %11 : i1 to i32
    %c0_i32_11 = arith.constant 0 : i32
    %13 = arith.cmpi ne, %12, %c0_i32_11 : i32
    scf.if %13 {
      %c0_12 = arith.constant 0 : index
      %c0_13 = arith.constant 0 : index
      %14 = vector.load %arg8[%c0_12, %c0_13] : memref<512x128xf32, #tpu.memory_space<vmem>>, vector<512x128xf32>
      %15 = arith.truncf %14 : vector<512x128xf32> to vector<512x128xbf16>
      %c0_14 = arith.constant 0 : index
      %c0_15 = arith.constant 0 : index
      %c0_16 = arith.constant 0 : index
      %16 = vector.load %arg5[%c0_14, %c0_15, %c0_16] : memref<1x512x128xbf16, #tpu.memory_space<vmem>>, vector<1x512x128xbf16>
      %17 = vector.shape_cast %16 : vector<1x512x128xbf16> to vector<512x128xbf16>
      %18 = vector.shape_cast %15 : vector<512x128xbf16> to vector<1x512x128xbf16>
      tpu.vector_store %arg5[%c0_14, %c0_15, %c0_16], %18 {strides = array<i32>} : memref<1x512x128xbf16, #tpu.memory_space<vmem>>, vector<1x512x128xbf16>,
      %cst_17 = arith.constant dense<0.000000e+00> : vector<128xf32>
      %19 = vector.multi_reduction <add>, %14, %cst_17 [0] : vector<512x128xf32> to vector<128xf32>
      %20 = vector.shape_cast %19 : vector<128xf32> to vector<1x128xf32>
      %c0_18 = arith.constant 0 : index
      %c0_19 = arith.constant 0 : index
      %c0_20 = arith.constant 0 : index
      %c0_21 = arith.constant 0 : index
      %21 = vector.load %arg6[%c0_18, %c0_19, %c0_20, %c0_21] : memref<1x1x1x128xf32, #tpu.memory_space<vmem>>, vector<1x1x1x128xf32>
      %22 = vector.shape_cast %21 : vector<1x1x1x128xf32> to vector<1x128xf32>
      %23 = vector.shape_cast %20 : vector<1x128xf32> to vector<1x1x1x128xf32>
      tpu.vector_store %arg6[%c0_18, %c0_19, %c0_20, %c0_21], %23 {strides = array<i32>} : memref<1x1x1x128xf32, #tpu.memory_space<vmem>>, vector<1x1x1x128xf32>,
      %24 = arith.mulf %14, %14 : vector<512x128xf32>
      %cst_22 = arith.constant dense<0.000000e+00> : vector<128xf32>
      %25 = vector.multi_reduction <add>, %24, %cst_22 [0] : vector<512x128xf32> to vector<128xf32>
      %26 = vector.shape_cast %25 : vector<128xf32> to vector<1x128xf32>
      %c0_23 = arith.constant 0 : index
      %c0_24 = arith.constant 0 : index
      %c0_25 = arith.constant 0 : index
      %c0_26 = arith.constant 0 : index
      %27 = vector.load %arg7[%c0_23, %c0_24, %c0_25, %c0_26] : memref<1x1x1x128xf32, #tpu.memory_space<vmem>>, vector<1x1x1x128xf32>
      %28 = vector.shape_cast %27 : vector<1x1x1x128xf32> to vector<1x128xf32>
      %29 = vector.shape_cast %26 : vector<1x128xf32> to vector<1x1x1x128xf32>
      tpu.vector_store %arg7[%c0_23, %c0_24, %c0_25, %c0_26], %29 {strides = array<i32>} : memref<1x1x1x128xf32, #tpu.memory_space<vmem>>, vector<1x1x1x128xf32>,
    } else {
    }
    return
  }
  func.func @transform_0(%arg0: i32, %arg1: i32, %arg2: i32) -> (i32, i32, i32) {
    %c0_i32 = arith.constant 0 : i32
    return %arg0, %arg1, %arg2 : i32, i32, i32
  }
  func.func @transform_1(%arg0: i32, %arg1: i32, %arg2: i32) -> (i32, i32, i32) {
    %c0_i32 = arith.constant 0 : i32
    %c0_i32_0 = arith.constant 0 : i32
    return %arg0, %arg2, %c0_i32 : i32, i32, i32
  }
  func.func @transform_2(%arg0: i32, %arg1: i32, %arg2: i32) -> (i32, i32, i32) {
    %c0_i32 = arith.constant 0 : i32
    %c0_i32_0 = arith.constant 0 : i32
    return %arg0, %arg1, %c0_i32 : i32, i32, i32
  }
  func.func @transform_3(%arg0: i32, %arg1: i32, %arg2: i32) -> (i32, i32, i32, i32) {
    %c0_i32 = arith.constant 0 : i32
    %c0_i32_0 = arith.constant 0 : i32
    %c0_i32_1 = arith.constant 0 : i32
    return %arg0, %arg1, %c0_i32, %c0_i32_0 : i32, i32, i32, i32
  }
  func.func @transform_4(%arg0: i32, %arg1: i32, %arg2: i32) -> (i32, i32, i32, i32) {
    %c0_i32 = arith.constant 0 : i32
    %c0_i32_0 = arith.constant 0 : i32
    %c0_i32_1 = arith.constant 0 : i32
    return %arg0, %arg1, %c0_i32, %c0_i32_0 : i32, i32, i32, i32
  }
}

</mosaic_0001>

<llo_original>
// kernel: mul.17
$region0: #{mul.17}
  #allocation2 [shape = 's32[1]{0}', space=sflag, size = 0x4, scoped, tag = 'scoped memory for mul.17']
  %s0 = inlined_call_operand.<no memory space> [shape: f32[], index: 0, kind: input, shape index: {}]
  %s1 = inlined_call_operand.hbm [shape: f32[4,1,1,8], index: 1, kind: output, shape index: {}]
  %v2 = vstv %s0
  $region1: #{mul.17} parent=0
    #allocation0 [shape = 'u8[2048]{0}', space=vmem, size = 0x800, scoped, tag = 'operand span for operand 1']
    #allocation1 [shape = 's32[1]{0}', space=sflag, size = 0x4, scoped, tag = 'scoped memory for mul.17']
    %3 = vsyncpa [#allocation1], 0
    %4 = vst [vmem:[#allocation0] sm:$0xf] %v2
    %s6 = ssub.s32 64, 64
    %7 = vsyncadd [#allocation1], %s6
    %s9 = sshll.u32 [#allocation0], 4
    %s10 = int_to_ptr.vmem [resolvable:$true] %s9
    %12 = dma.vmem_to_hbm [thread:$0]  %s10, 64, %s1, [#allocation1]
    %13 = dma.done [#allocation1], 64
    %14 = vsyncpa [#allocation1], 1

// kernel: conv_transpose2d_block.1
$region0: #{conv_transpose2d_block.1}
  #allocation0 [shape = 'u32[]', space=smem, size = 0x4, offset = 0x4, fixed_abs, tag = 'smem constant byte address 0x4 - core index']
  #allocation1 [shape = 'u32[144,128]{1,0:T(1,128)}', space=vmem, size = 0x12000, scoped, tag = 'internal scratch']
  #allocation2 [shape = 'f32[512,128]{1,0:T(8,128)}', space=vmem, size = 0x40000, scoped, tag = 'scratch operand']
  %s0 = inlined_call_operand.hbm [shape: bf16[4,512,16], index: 0, kind: input, shape index: {}]
  %s1 = inlined_call_operand.hbm [shape: bf16[4,16,128], index: 1, kind: input, shape index: {}]
  %s2 = inlined_call_operand.hbm [shape: bf16[4,512,128], index: 2, kind: output, shape index: {0}]
  %s3 = inlined_call_operand.hbm [shape: f32[4,1,1,128], index: 3, kind: output, shape index: {1}]
  %s4 = inlined_call_operand.hbm [shape: f32[4,1,1,128], index: 4, kind: output, shape index: {2}]
  %5 = xla_tuple %s2, %s3, %s4
  %s6 = sld [smem:[#allocation0]]
  $region73: #{conv_transpose2d_block.1} parent=0
    _
  %s8 = ssub.s32 1, %s6
  %s9 = scalar_select 0, %s8, %s6
  $region1: #{conv_transpose2d_block.1} parent=0
    #allocation3 [shape = 'u8[262144]{0}', space=vmem, size = 0x40000, scoped, tag = 'input window, operand 0']
    #allocation4 [shape = 's32[2]{0}', space=sflag, size = 0x8, scoped, tag = 'scoped memory for conv_transpose2d_block.1']
    #allocation5 [shape = 's32[2]{0}', space=sflag, size = 0x8, scoped, tag = 'scoped memory for conv_transpose2d_block.1']
    #allocation6 [shape = 'u8[8192]{0}', space=vmem, size = 0x2000, scoped, tag = 'input window, operand 1']
    #allocation7 [shape = 's32[2]{0}', space=sflag, size = 0x8, scoped, tag = 'scoped memory for conv_transpose2d_block.1']
    #allocation8 [shape = 'u8[262144]{0}', space=vmem, size = 0x40000, scoped, tag = 'output window, operand 0']
    #allocation9 [shape = 'u8[1024]{0}', space=vmem, size = 0x400, scoped, tag = 'output window, operand 1']
    #allocation10 [shape = 's32[2]{0}', space=sflag, size = 0x8, scoped, tag = 'scoped memory for conv_transpose2d_block.1']
    #allocation11 [shape = 'u8[1024]{0}', space=vmem, size = 0x400, scoped, tag = 'output window, operand 2']
    %10 = vsyncpa [#allocation4], 0
    %s11 = scalar_lea.sflag [#allocation4], 1
    %12 = vsyncpa %s11, 0
    %13 = vsyncpa [#allocation7], 0
    %s14 = scalar_lea.sflag [#allocation7], 1
    %15 = vsyncpa %s14, 0
    %16 = vsyncpa [#allocation5], 0
    %s17 = scalar_lea.sflag [#allocation5], 1
    %18 = vsyncpa %s17, 0
    %19 = vsyncpa [#allocation10], 0
    %s20 = scalar_lea.sflag [#allocation10], 1
    %21 = vsyncpa %s20, 0
    loop: start=0, step=1, limit=6
    $region2: #{conv_transpose2d_block.1} parent=1 // loop_pre_header
      _
    $region3: #{conv_transpose2d_block.1} parent=1 // loop_header
      %s23 = sphi 0, %s27
      %p24 = scmp.ge.s32.totalorder %s23, 6
      %s30 = sphi 0, %s49
      %s31 = sphi 0, %s45
      %s32 = sphi 0, %s41
      %s33 = sphi 0, %s30
      %s34 = sphi 0, %s31
      %s35 = sphi 0, %s32
      %s36 = sphi 0, %s33
      %s37 = sphi 0, %s34
      %s38 = sphi 0, %s35
      %s56 = sphi 0, %s58
      %s59 = sphi 0, %s56
      %s60 = sphi 0, %s59
      %s76 = sphi 0, %s60
      %s84 = sphi 0, %s86
      %s87 = sphi 0, %s84
      %s88 = sphi 0, %s87
      %s104 = sphi 0, %s88
      %s112 = sphi 0, %s114
      %s115 = sphi 0, %s112
      %s116 = sphi 0, %s115
      %s132 = sphi 0, %s116
      %s140 = sphi 0, %s142
      %s143 = sphi 0, %s140
      %s144 = sphi 0, %s143
      %s160 = sphi 0, %s144
      %s168 = sphi 0, %s170
      %s171 = sphi 0, %s168
      %s172 = sphi 0, %s171
      %s188 = sphi 0, %s172
    $region4: #{conv_transpose2d_block.1} parent=1 // loop_header_branch
      %26 = sbr.rel (%p24) target = $region8
    $region5: #{conv_transpose2d_block.1} parent=1 // loop_body
      %s28 = ssub.s32 %s23, 1
      %s29 = ssub.s32 %s23, 2
      %s39 = sadd.s32 1, %s32
      %p40 = scmp.ge.s32.totalorder %s39, 1
      %s41 = scalar_select %p40, 0, %s39
      %s42 = sadd.s32 1, %s31
      %s43 = scalar_select %p40, %s42, %s31
      %p44 = scmp.ge.s32.totalorder %s43, 1
      %s45 = scalar_select %p44, 0, %s43
      %s46 = sadd.s32 1, %s30
      %s47 = scalar_select %p44, %s46, %s30
      %p48 = scmp.ge.s32.totalorder %s47, 4
      %s49 = scalar_select %p48, 0, %s47
      %s50 = ssub.s32 %s30, %s49
      %s51 = ssub.s32 %s31, %s45
      %s52 = sor.u32 %s50, %s51
      %s53 = ssub.s32 %s32, %s41
      %s54 = sor.u32 %s52, %s53
      %p55 = scmp.eq.s32.totalorder %s54, 0
      %s57 = sadd.s32 %s56, 1
      %s58 = scalar_select %p55, %s56, %s57
      %p61 = pneg %p55
      %p62 = scmp.eq.s32.totalorder %s23, 3
      %p63 = por %p61, %p62
      %p64 = scmp.ne.s32.totalorder %s56, %s59
      %p65 = scmp.eq.s32.totalorder %s23, 0
      %p66 = por %p64, %p65
      %p67 = scmp.ne.s32.totalorder %s56, %s59
      %p68 = scmp.eq.s32.totalorder %s28, 3
      %p69 = por %p67, %p68
      %p70 = scmp.ne.s32.totalorder %s59, %s60
      %p71 = scmp.eq.s32.totalorder %s28, 0
      %p72 = por %p70, %p71
      %p73 = scmp.ne.s32.totalorder %s59, %s60
      %p74 = scmp.eq.s32.totalorder %s29, 3
      %p75 = por %p73, %p74
      %p77 = scmp.ne.s32.totalorder %s60, %s76
      %p78 = scmp.eq.s32.totalorder %s29, 0
      %p79 = por %p77, %p78
      %s80 = ssub.s32 %s30, %s49
      %s81 = ssub.s32 %s32, %s41
      %s82 = sor.u32 %s80, %s81
      %p83 = scmp.eq.s32.totalorder %s82, 0
      %s85 = sadd.s32 %s84, 1
      %s86 = scalar_select %p83, %s84, %s85
      %p89 = pneg %p83
      %p90 = scmp.eq.s32.totalorder %s23, 3
      %p91 = por %p89, %p90
      %p92 = scmp.ne.s32.totalorder %s84, %s87
      %p93 = scmp.eq.s32.totalorder %s23, 0
      %p94 = por %p92, %p93
      %p95 = scmp.ne.s32.totalorder %s84, %s87
      %p96 = scmp.eq.s32.totalorder %s28, 3
      %p97 = por %p95, %p96
      %p98 = scmp.ne.s32.totalorder %s87, %s88
      %p99 = scmp.eq.s32.totalorder %s28, 0
      %p100 = por %p98, %p99
      %p101 = scmp.ne.s32.totalorder %s87, %s88
      %p102 = scmp.eq.s32.totalorder %s29, 3
      %p103 = por %p101, %p102
      %p105 = scmp.ne.s32.totalorder %s88, %s104
      %p106 = scmp.eq.s32.totalorder %s29, 0
      %p107 = por %p105, %p106
      %s108 = ssub.s32 %s30, %s49
      %s109 = ssub.s32 %s31, %s45
      %s110 = sor.u32 %s108, %s109
      %p111 = scmp.eq.s32.totalorder %s110, 0
      %s113 = sadd.s32 %s112, 1
      %s114 = scalar_select %p111, %s112, %s113
      %p117 = pneg %p111
      %p118 = scmp.eq.s32.totalorder %s23, 3
      %p119 = por %p117, %p118
      %p120 = scmp.ne.s32.totalorder %s112, %s115
      %p121 = scmp.eq.s32.totalorder %s23, 0
      %p122 = por %p120, %p121
      %p123 = scmp.ne.s32.totalorder %s112, %s115
      %p124 = scmp.eq.s32.totalorder %s28, 3
      %p125 = por %p123, %p124
      %p126 = scmp.ne.s32.totalorder %s115, %s116
      %p127 = scmp.eq.s32.totalorder %s28, 0
      %p128 = por %p126, %p127
      %p129 = scmp.ne.s32.totalorder %s115, %s116
      %p130 = scmp.eq.s32.totalorder %s29, 3
      %p131 = por %p129, %p130
      %p133 = scmp.ne.s32.totalorder %s116, %s132
      %p134 = scmp.eq.s32.totalorder %s29, 0
      %p135 = por %p133, %p134
      %s136 = ssub.s32 %s30, %s49
      %s137 = ssub.s32 %s31, %s45
      %s138 = sor.u32 %s136, %s137
      %p139 = scmp.eq.s32.totalorder %s138, 0
      %s141 = sadd.s32 %s140, 1
      %s142 = scalar_select %p139, %s140, %s141
      %p145 = pneg %p139
      %p146 = scmp.eq.s32.totalorder %s23, 3
      %p147 = por %p145, %p146
      %p148 = scmp.ne.s32.totalorder %s140, %s143
      %p149 = scmp.eq.s32.totalorder %s23, 0
      %p150 = por %p148, %p149
      %p151 = scmp.ne.s32.totalorder %s140, %s143
      %p152 = scmp.eq.s32.totalorder %s28, 3
      %p153 = por %p151, %p152
      %p154 = scmp.ne.s32.totalorder %s143, %s144
      %p155 = scmp.eq.s32.totalorder %s28, 0
      %p156 = por %p154, %p155
      %p157 = scmp.ne.s32.totalorder %s143, %s144
      %p158 = scmp.eq.s32.totalorder %s29, 3
      %p159 = por %p157, %p158
      %p161 = scmp.ne.s32.totalorder %s144, %s160
      %p162 = scmp.eq.s32.totalorder %s29, 0
      %p163 = por %p161, %p162
      %s164 = ssub.s32 %s30, %s49
      %s165 = ssub.s32 %s31, %s45
      %s166 = sor.u32 %s164, %s165
      %p167 = scmp.eq.s32.totalorder %s166, 0
      %s169 = sadd.s32 %s168, 1
      %s170 = scalar_select %p167, %s168, %s169
      %p173 = pneg %p167
      %p174 = scmp.eq.s32.totalorder %s23, 3
      %p175 = por %p173, %p174
      %p176 = scmp.ne.s32.totalorder %s168, %s171
      %p177 = scmp.eq.s32.totalorder %s23, 0
      %p178 = por %p176, %p177
      %p179 = scmp.ne.s32.totalorder %s168, %s171
      %p180 = scmp.eq.s32.totalorder %s28, 3
      %p181 = por %p179, %p180
      %p182 = scmp.ne.s32.totalorder %s171, %s172
      %p183 = scmp.eq.s32.totalorder %s28, 0
      %p184 = por %p182, %p183
      %p185 = scmp.ne.s32.totalorder %s171, %s172
      %p186 = scmp.eq.s32.totalorder %s29, 3
      %p187 = por %p185, %p186
      %p189 = scmp.ne.s32.totalorder %s172, %s188
      %p190 = scmp.eq.s32.totalorder %s29, 0
      %p191 = por %p189, %p190
      %p192 = scmp.le.s32.totalorder 1, %s23
      %p193 = scmp.lt.s32.totalorder %s23, 5
      %p194 = pnand %p192, %p193
      %p195 = pneg %p194
      // Predicated region
      $region9: #{conv_transpose2d_block.1} parent=5 // pred_check
        _
      $region10: #{conv_transpose2d_block.1} parent=5 // pred_check_branch
        %197 = sbr.rel (%p194) target = $region12
      $region11: #{conv_transpose2d_block.1} parent=5 // pred_region
        %s198 = ssub.s32 %s23, 1
      $region12: #{conv_transpose2d_block.1} parent=5 // pred_fallthru
        _
      %p199 = scmp.lt.s32.totalorder %s23, 4
      // Predicated region
      $region13: #{conv_transpose2d_block.1} parent=5 // pred_check
        %p200 = pneg %p199
      $region14: #{conv_transpose2d_block.1} parent=5 // pred_check_branch
        %202 = sbr.rel (%p200) target = $region16
      $region15: #{conv_transpose2d_block.1} parent=5 // pred_region
        // Predicated region
        $region17: #{conv_transpose2d_block.1} parent=15 // pred_check
          %p203 = pneg %p66
        $region18: #{conv_transpose2d_block.1} parent=15 // pred_check_branch
          %205 = sbr.rel (%p203) target = $region20
        $region19: #{conv_transpose2d_block.1} parent=15 // pred_region
          %s206 = sand.u32 %s56, 1
          %s207 = scalar_lea.sflag [#allocation4], %s206
          %s208 = sand.u32 %s56, 1
          %s209 = smul.addr %s208, 256
          %s210 = scalar_lea.vmem [#allocation3], %s209
          %s211 = smul.u32 64, %s31
          %s213 = ssub.s32 4096, 4096
          %214 = vsyncadd %s207, %s213
          %s215 = sadd.s32 %s32, %s211
          %s216 = smul.addr %s30, 64
          %s217 = sadd.s32 %s215, %s216
          %s218 = smul.addr %s217, 64
          %s219 = scalar_lea.hbm %s0, %s218
          %s220 = sshll.u32 %s210, 4
          %s221 = int_to_ptr.vmem [resolvable:$true] %s220
          %226 = dma.hbm_to_vmem [thread:$0]  %s219, 4096, %s221, %s207, 64, 64, 4
        $region20: #{conv_transpose2d_block.1} parent=15 // pred_fallthru
          _
        // Predicated region
        $region21: #{conv_transpose2d_block.1} parent=15 // pred_check
          %p227 = pneg %p94
        $region22: #{conv_transpose2d_block.1} parent=15 // pred_check_branch
          %229 = sbr.rel (%p227) target = $region24
        $region23: #{conv_transpose2d_block.1} parent=15 // pred_region
          %s230 = sand.u32 %s84, 1
          %s231 = scalar_lea.sflag [#allocation7], %s230
          %s232 = sand.u32 %s84, 1
          %s233 = smul.addr %s232, 8
          %s234 = scalar_lea.vmem [#allocation6], %s233
          %s235 = smul.u32 2, %s32
          %s237 = ssub.s32 128, 128
          %238 = vsyncadd %s231, %s237
          %s239 = smul.addr %s30, 2
          %s240 = sadd.s32 %s235, %s239
          %s241 = smul.addr %s240, 64
          %s242 = scalar_lea.hbm %s1, %s241
          %s243 = sshll.u32 %s234, 4
          %s244 = int_to_ptr.vmem [resolvable:$true] %s243
          %249 = dma.hbm_to_vmem [thread:$0]  %s242, 128, %s244, %s231, 64, 64, 4
        $region24: #{conv_transpose2d_block.1} parent=15 // pred_fallthru
          _
      $region16: #{conv_transpose2d_block.1} parent=5 // pred_fallthru
        _
      %p250 = scmp.le.s32.totalorder 1, %s23
      %p251 = scmp.lt.s32.totalorder %s23, 5
      %p252 = pnand %p250, %p251
      %p253 = pneg %p252
      // Predicated region
      $region25: #{conv_transpose2d_block.1} parent=5 // pred_check
        _
      $region26: #{conv_transpose2d_block.1} parent=5 // pred_check_branch
        %255 = sbr.rel (%p252) target = $region28
      $region27: #{conv_transpose2d_block.1} parent=5 // pred_region
        %s256 = ssub.s32 %s23, 1
        %s257 = sand.u32 %s59, 1
        %s258 = scalar_lea.sflag [#allocation4], %s257
        %s259 = sand.u32 %s59, 1
        %s260 = smul.addr %s259, 256
        %s261 = scalar_lea.vmem [#allocation3], %s260
        // Predicated region
        $region29: #{conv_transpose2d_block.1} parent=27 // pred_check
          %p262 = pneg %p72
        $region30: #{conv_transpose2d_block.1} parent=27 // pred_check_branch
          %264 = sbr.rel (%p262) target = $region32
        $region31: #{conv_transpose2d_block.1} parent=27 // pred_region
          %265 = dma.done %s258, 4096
        $region32: #{conv_transpose2d_block.1} parent=27 // pred_fallthru
          _
        %s266 = sand.u32 %s87, 1
        %s267 = scalar_lea.sflag [#allocation7], %s266
        %s268 = sand.u32 %s87, 1
        %s269 = smul.addr %s268, 8
        %s270 = scalar_lea.vmem [#allocation6], %s269
        // Predicated region
        $region33: #{conv_transpose2d_block.1} parent=27 // pred_check
          %p271 = pneg %p100
        $region34: #{conv_transpose2d_block.1} parent=27 // pred_check_branch
          %273 = sbr.rel (%p271) target = $region36
        $region35: #{conv_transpose2d_block.1} parent=27 // pred_region
          %274 = dma.done %s267, 128
        $region36: #{conv_transpose2d_block.1} parent=27 // pred_fallthru
          _
        %s275 = sand.u32 %s59, 1
        %s276 = scalar_lea.sflag [#allocation4], %s275
        %s277 = sand.u32 %s59, 1
        %s278 = smul.addr %s277, 256
        %s279 = scalar_lea.vmem [#allocation3], %s278
        %p280 = pneg %p72
        %p281 = pneg %p69
        %s282 = sand.u32 %s87, 1
        %s283 = scalar_lea.sflag [#allocation7], %s282
        %s284 = sand.u32 %s87, 1
        %s285 = smul.addr %s284, 8
        %s286 = scalar_lea.vmem [#allocation6], %s285
        %p287 = pneg %p100
        %p288 = pneg %p97
        %p289 = pneg %p128
        %p290 = pneg %p125
        %s291 = sand.u32 %s115, 1
        %s292 = scalar_lea.sflag [#allocation5], %s291
        %s293 = sand.u32 %s115, 1
        %s294 = smul.addr %s293, 256
        %s295 = scalar_lea.vmem [#allocation8], %s294
        %p296 = pneg %p156
        %p297 = pneg %p153
        %s298 = sand.u32 %s28, 1
        %s299 = scalar_lea.sflag [#allocation10], %s298
        %s300 = sand.u32 %s143, 1
        %s301 = scalar_lea.vmem [#allocation9], %s300
        %p302 = pneg %p184
        %p303 = pneg %p181
        %s304 = sand.u32 %s28, 1
        %s305 = scalar_lea.sflag [#allocation10], %s304
        %s306 = sand.u32 %s171, 1
        %s307 = scalar_lea.vmem [#allocation11], %s306
        %s308 = smul.u32 64, %s34
        %s309 = smul.u32 2, %s35
        %s310 = smul.u32 64, %s34
        %p312 = scmp.eq.s32.totalorder %s35, 0
        // Predicated region
        $region37: #{conv_transpose2d_block.1} parent=27 // pred_check
          %p313 = pneg %p312
        $region38: #{conv_transpose2d_block.1} parent=27 // pred_check_branch
          %315 = sbr.rel (%p313) target = $region40
        $region39: #{conv_transpose2d_block.1} parent=27 // pred_region
          %316 = vst [vmem:[#allocation2] sm:$0xff] 0.0
          %317 = vst [vmem:[#allocation2 + $0x8] sm:$0xff] 0.0
          %318 = vst [vmem:[#allocation2 + $0x10] sm:$0xff] 0.0
          %319 = vst [vmem:[#allocation2 + $0x18] sm:$0xff] 0.0
          %320 = vst [vmem:[#allocation2 + $0x20] sm:$0xff] 0.0
          %321 = vst [vmem:[#allocation2 + $0x28] sm:$0xff] 0.0
          %322 = vst [vmem:[#allocation2 + $0x30] sm:$0xff] 0.0
          %323 = vst [vmem:[#allocation2 + $0x38] sm:$0xff] 0.0
          %324 = vst [vmem:[#allocation2 + $0x40] sm:$0xff] 0.0
          %325 = vst [vmem:[#allocation2 + $0x48] sm:$0xff] 0.0
          %326 = vst [vmem:[#allocation2 + $0x50] sm:$0xff] 0.0
          %327 = vst [vmem:[#allocation2 + $0x58] sm:$0xff] 0.0
          %328 = vst [vmem:[#allocation2 + $0x60] sm:$0xff] 0.0
          %329 = vst [vmem:[#allocation2 + $0x68] sm:$0xff] 0.0
          %330 = vst [vmem:[#allocation2 + $0x70] sm:$0xff] 0.0
          %331 = vst [vmem:[#allocation2 + $0x78] sm:$0xff] 0.0
          %332 = vst [vmem:[#allocation2 + $0x80] sm:$0xff] 0.0
          %333 = vst [vmem:[#allocation2 + $0x88] sm:$0xff] 0.0
          %334 = vst [vmem:[#allocation2 + $0x90] sm:$0xff] 0.0
          %335 = vst [vmem:[#allocation2 + $0x98] sm:$0xff] 0.0
          %336 = vst [vmem:[#allocation2 + $0xa0] sm:$0xff] 0.0
          %337 = vst [vmem:[#allocation2 + $0xa8] sm:$0xff] 0.0
          %338 = vst [vmem:[#allocation2 + $0xb0] sm:$0xff] 0.0
          %339 = vst [vmem:[#allocation2 + $0xb8] sm:$0xff] 0.0
          %340 = vst [vmem:[#allocation2 + $0xc0] sm:$0xff] 0.0
          %341 = vst [vmem:[#allocation2 + $0xc8] sm:$0xff] 0.0
          %342 = vst [vmem:[#allocation2 + $0xd0] sm:$0xff] 0.0
          %343 = vst [vmem:[#allocation2 + $0xd8] sm:$0xff] 0.0
          %344 = vst [vmem:[#allocation2 + $0xe0] sm:$0xff] 0.0
          %345 = vst [vmem:[#allocation2 + $0xe8] sm:$0xff] 0.0
          %346 = vst [vmem:[#allocation2 + $0xf0] sm:$0xff] 0.0
          %347 = vst [vmem:[#allocation2 + $0xf8] sm:$0xff] 0.0
          %348 = vst [vmem:[#allocation2 + $0x100] sm:$0xff] 0.0
          %349 = vst [vmem:[#allocation2 + $0x108] sm:$0xff] 0.0
          %350 = vst [vmem:[#allocation2 + $0x110] sm:$0xff] 0.0
          %351 = vst [vmem:[#allocation2 + $0x118] sm:$0xff] 0.0
          %352 = vst [vmem:[#allocation2 + $0x120] sm:$0xff] 0.0
          %353 = vst [vmem:[#allocation2 + $0x128] sm:$0xff] 0.0
          %354 = vst [vmem:[#allocation2 + $0x130] sm:$0xff] 0.0
          %355 = vst [vmem:[#allocation2 + $0x138] sm:$0xff] 0.0
          %356 = vst [vmem:[#allocation2 + $0x140] sm:$0xff] 0.0
          %357 = vst [vmem:[#allocation2 + $0x148] sm:$0xff] 0.0
          %358 = vst [vmem:[#allocation2 + $0x150] sm:$0xff] 0.0
          %359 = vst [vmem:[#allocation2 + $0x158] sm:$0xff] 0.0
          %360 = vst [vmem:[#allocation2 + $0x160] sm:$0xff] 0.0
          %361 = vst [vmem:[#allocation2 + $0x168] sm:$0xff] 0.0
          %362 = vst [vmem:[#allocation2 + $0x170] sm:$0xff] 0.0
          %363 = vst [vmem:[#allocation2 + $0x178] sm:$0xff] 0.0
          %364 = vst [vmem:[#allocation2 + $0x180] sm:$0xff] 0.0
          %365 = vst [vmem:[#allocation2 + $0x188] sm:$0xff] 0.0
          %366 = vst [vmem:[#allocation2 + $0x190] sm:$0xff] 0.0
          %367 = vst [vmem:[#allocation2 + $0x198] sm:$0xff] 0.0
          %368 = vst [vmem:[#allocation2 + $0x1a0] sm:$0xff] 0.0
          %369 = vst [vmem:[#allocation2 + $0x1a8] sm:$0xff] 0.0
          %370 = vst [vmem:[#allocation2 + $0x1b0] sm:$0xff] 0.0
          %371 = vst [vmem:[#allocation2 + $0x1b8] sm:$0xff] 0.0
          %372 = vst [vmem:[#allocation2 + $0x1c0] sm:$0xff] 0.0
          %373 = vst [vmem:[#allocation2 + $0x1c8] sm:$0xff] 0.0
          %374 = vst [vmem:[#allocation2 + $0x1d0] sm:$0xff] 0.0
          %375 = vst [vmem:[#allocation2 + $0x1d8] sm:$0xff] 0.0
          %376 = vst [vmem:[#allocation2 + $0x1e0] sm:$0xff] 0.0
          %377 = vst [vmem:[#allocation2 + $0x1e8] sm:$0xff] 0.0
          %378 = vst [vmem:[#allocation2 + $0x1f0] sm:$0xff] 0.0
          %379 = vst [vmem:[#allocation2 + $0x1f8] sm:$0xff] 0.0
        $region40: #{conv_transpose2d_block.1} parent=27 // pred_fallthru
          _
        %v380 = vld [vmem:[#allocation2] sm:$0xff]
        %v381 = vld [vmem:[#allocation2 + $0x8] sm:$0xff]
        %v382 = vld [vmem:[#allocation2 + $0x10] sm:$0xff]
        %v383 = vld [vmem:[#allocation2 + $0x18] sm:$0xff]
        %v384 = vld [vmem:[#allocation2 + $0x20] sm:$0xff]
        %v385 = vld [vmem:[#allocation2 + $0x28] sm:$0xff]
        %v386 = vld [vmem:[#allocation2 + $0x30] sm:$0xff]
        %v387 = vld [vmem:[#allocation2 + $0x38] sm:$0xff]
        %v388 = vld [vmem:[#allocation2 + $0x40] sm:$0xff]
        %v389 = vld [vmem:[#allocation2 + $0x48] sm:$0xff]
        %v390 = vld [vmem:[#allocation2 + $0x50] sm:$0xff]
        %v391 = vld [vmem:[#allocation2 + $0x58] sm:$0xff]
        %v392 = vld [vmem:[#allocation2 + $0x60] sm:$0xff]
        %v393 = vld [vmem:[#allocation2 + $0x68] sm:$0xff]
        %v394 = vld [vmem:[#allocation2 + $0x70] sm:$0xff]
        %v395 = vld [vmem:[#allocation2 + $0x78] sm:$0xff]
        %v396 = vld [vmem:[#allocation2 + $0x80] sm:$0xff]
        %v397 = vld [vmem:[#allocation2 + $0x88] sm:$0xff]
        %v398 = vld [vmem:[#allocation2 + $0x90] sm:$0xff]
        %v399 = vld [vmem:[#allocation2 + $0x98] sm:$0xff]
        %v400 = vld [vmem:[#allocation2 + $0xa0] sm:$0xff]
        %v401 = vld [vmem:[#allocation2 + $0xa8] sm:$0xff]
        %v402 = vld [vmem:[#allocation2 + $0xb0] sm:$0xff]
        %v403 = vld [vmem:[#allocation2 + $0xb8] sm:$0xff]
        %v404 = vld [vmem:[#allocation2 + $0xc0] sm:$0xff]
        %v405 = vld [vmem:[#allocation2 + $0xc8] sm:$0xff]
        %v406 = vld [vmem:[#allocation2 + $0xd0] sm:$0xff]
        %v407 = vld [vmem:[#allocation2 + $0xd8] sm:$0xff]
        %v408 = vld [vmem:[#allocation2 + $0xe0] sm:$0xff]
        %v409 = vld [vmem:[#allocation2 + $0xe8] sm:$0xff]
        %v410 = vld [vmem:[#allocation2 + $0xf0] sm:$0xff]
        %v411 = vld [vmem:[#allocation2 + $0xf8] sm:$0xff]
        %v412 = vld [vmem:[#allocation2 + $0x100] sm:$0xff]
        %v413 = vld [vmem:[#allocation2 + $0x108] sm:$0xff]
        %v414 = vld [vmem:[#allocation2 + $0x110] sm:$0xff]
        %v415 = vld [vmem:[#allocation2 + $0x118] sm:$0xff]
        %v416 = vld [vmem:[#allocation2 + $0x120] sm:$0xff]
        %v417 = vld [vmem:[#allocation2 + $0x128] sm:$0xff]
        %v418 = vld [vmem:[#allocation2 + $0x130] sm:$0xff]
        %v419 = vld [vmem:[#allocation2 + $0x138] sm:$0xff]
        %v420 = vld [vmem:[#allocation2 + $0x140] sm:$0xff]
        %v421 = vld [vmem:[#allocation2 + $0x148] sm:$0xff]
        %v422 = vld [vmem:[#allocation2 + $0x150] sm:$0xff]
        %v423 = vld [vmem:[#allocation2 + $0x158] sm:$0xff]
        %v424 = vld [vmem:[#allocation2 + $0x160] sm:$0xff]
        %v425 = vld [vmem:[#allocation2 + $0x168] sm:$0xff]
        %v426 = vld [vmem:[#allocation2 + $0x170] sm:$0xff]
        %v427 = vld [vmem:[#allocation2 + $0x178] sm:$0xff]
        %v428 = vld [vmem:[#allocation2 + $0x180] sm:$0xff]
        %v429 = vld [vmem:[#allocation2 + $0x188] sm:$0xff]
        %v430 = vld [vmem:[#allocation2 + $0x190] sm:$0xff]
        %v431 = vld [vmem:[#allocation2 + $0x198] sm:$0xff]
        %v432 = vld [vmem:[#allocation2 + $0x1a0] sm:$0xff]
        %v433 = vld [vmem:[#allocation2 + $0x1a8] sm:$0xff]
        %v434 = vld [vmem:[#allocation2 + $0x1b0] sm:$0xff]
        %v435 = vld [vmem:[#allocation2 + $0x1b8] sm:$0xff]
        %v436 = vld [vmem:[#allocation2 + $0x1c0] sm:$0xff]
        %v437 = vld [vmem:[#allocation2 + $0x1c8] sm:$0xff]
        %v438 = vld [vmem:[#allocation2 + $0x1d0] sm:$0xff]
        %v439 = vld [vmem:[#allocation2 + $0x1d8] sm:$0xff]
        %v440 = vld [vmem:[#allocation2 + $0x1e0] sm:$0xff]
        %v441 = vld [vmem:[#allocation2 + $0x1e8] sm:$0xff]
        %v442 = vld [vmem:[#allocation2 + $0x1f0] sm:$0xff]
        %v443 = vld [vmem:[#allocation2 + $0x1f8] sm:$0xff]
        %v444 = vld [vmem:[%s261] sm:$0xf]
        %v445 = vld [vmem:[%s261 + $0x4] sm:$0xf]
        %v446 = vld [vmem:[%s261 + $0x8] sm:$0xf]
        %v447 = vld [vmem:[%s261 + $0xc] sm:$0xf]
        %v448 = vld [vmem:[%s261 + $0x10] sm:$0xf]
        %v449 = vld [vmem:[%s261 + $0x14] sm:$0xf]
        %v450 = vld [vmem:[%s261 + $0x18] sm:$0xf]
        %v451 = vld [vmem:[%s261 + $0x1c] sm:$0xf]
        %v452 = vld [vmem:[%s261 + $0x20] sm:$0xf]
        %v453 = vld [vmem:[%s261 + $0x24] sm:$0xf]
        %v454 = vld [vmem:[%s261 + $0x28] sm:$0xf]
        %v455 = vld [vmem:[%s261 + $0x2c] sm:$0xf]
        %v456 = vld [vmem:[%s261 + $0x30] sm:$0xf]
        %v457 = vld [vmem:[%s261 + $0x34] sm:$0xf]
        %v458 = vld [vmem:[%s261 + $0x38] sm:$0xf]
        %v459 = vld [vmem:[%s261 + $0x3c] sm:$0xf]
        %v460 = vld [vmem:[%s261 + $0x40] sm:$0xf]
        %v461 = vld [vmem:[%s261 + $0x44] sm:$0xf]
        %v462 = vld [vmem:[%s261 + $0x48] sm:$0xf]
        %v463 = vld [vmem:[%s261 + $0x4c] sm:$0xf]
        %v464 = vld [vmem:[%s261 + $0x50] sm:$0xf]
        %v465 = vld [vmem:[%s261 + $0x54] sm:$0xf]
        %v466 = vld [vmem:[%s261 + $0x58] sm:$0xf]
        %v467 = vld [vmem:[%s261 + $0x5c] sm:$0xf]
        %v468 = vld [vmem:[%s261 + $0x60] sm:$0xf]
        %v469 = vld [vmem:[%s261 + $0x64] sm:$0xf]
        %v470 = vld [vmem:[%s261 + $0x68] sm:$0xf]
        %v471 = vld [vmem:[%s261 + $0x6c] sm:$0xf]
        %v472 = vld [vmem:[%s261 + $0x70] sm:$0xf]
        %v473 = vld [vmem:[%s261 + $0x74] sm:$0xf]
        %v474 = vld [vmem:[%s261 + $0x78] sm:$0xf]
        %v475 = vld [vmem:[%s261 + $0x7c] sm:$0xf]
        %v476 = vld [vmem:[%s261 + $0x80] sm:$0xf]
        %v477 = vld [vmem:[%s261 + $0x84] sm:$0xf]
        %v478 = vld [vmem:[%s261 + $0x88] sm:$0xf]
        %v479 = vld [vmem:[%s261 + $0x8c] sm:$0xf]
        %v480 = vld [vmem:[%s261 + $0x90] sm:$0xf]
        %v481 = vld [vmem:[%s261 + $0x94] sm:$0xf]
        %v482 = vld [vmem:[%s261 + $0x98] sm:$0xf]
        %v483 = vld [vmem:[%s261 + $0x9c] sm:$0xf]
        %v484 = vld [vmem:[%s261 + $0xa0] sm:$0xf]
        %v485 = vld [vmem:[%s261 + $0xa4] sm:$0xf]
        %v486 = vld [vmem:[%s261 + $0xa8] sm:$0xf]
        %v487 = vld [vmem:[%s261 + $0xac] sm:$0xf]
        %v488 = vld [vmem:[%s261 + $0xb0] sm:$0xf]
        %v489 = vld [vmem:[%s261 + $0xb4] sm:$0xf]
        %v490 = vld [vmem:[%s261 + $0xb8] sm:$0xf]
        %v491 = vld [vmem:[%s261 + $0xbc] sm:$0xf]
        %v492 = vld [vmem:[%s261 + $0xc0] sm:$0xf]
        %v493 = vld [vmem:[%s261 + $0xc4] sm:$0xf]
        %v494 = vld [vmem:[%s261 + $0xc8] sm:$0xf]
        %v495 = vld [vmem:[%s261 + $0xcc] sm:$0xf]
        %v496 = vld [vmem:[%s261 + $0xd0] sm:$0xf]
        %v497 = vld [vmem:[%s261 + $0xd4] sm:$0xf]
        %v498 = vld [vmem:[%s261 + $0xd8] sm:$0xf]
        %v499 = vld [vmem:[%s261 + $0xdc] sm:$0xf]
        %v500 = vld [vmem:[%s261 + $0xe0] sm:$0xf]
        %v501 = vld [vmem:[%s261 + $0xe4] sm:$0xf]
        %v502 = vld [vmem:[%s261 + $0xe8] sm:$0xf]
        %v503 = vld [vmem:[%s261 + $0xec] sm:$0xf]
        %v504 = vld [vmem:[%s261 + $0xf0] sm:$0xf]
        %v505 = vld [vmem:[%s261 + $0xf4] sm:$0xf]
        %v506 = vld [vmem:[%s261 + $0xf8] sm:$0xf]
        %v507 = vld [vmem:[%s261 + $0xfc] sm:$0xf]
        %v508 = vld [vmem:[%s270] sm:$0xf]
        %v509 = vld [vmem:[%s270 + $0x4] sm:$0xf]
        %v574 = vunpack.c.l.b16 %v444
        %v575 = vunpack.c.l.b16 %v445
        %v576 = vunpack.c.l.b16 %v446
        %v577 = vunpack.c.l.b16 %v447
        %v578 = vunpack.c.l.b16 %v448
        %v579 = vunpack.c.l.b16 %v449
        %v580 = vunpack.c.l.b16 %v450
        %v581 = vunpack.c.l.b16 %v451
        %v582 = vunpack.c.l.b16 %v452
        %v583 = vunpack.c.l.b16 %v453
        %v584 = vunpack.c.l.b16 %v454
        %v585 = vunpack.c.l.b16 %v455
        %v586 = vunpack.c.l.b16 %v456
        %v587 = vunpack.c.l.b16 %v457
        %v588 = vunpack.c.l.b16 %v458
        %v589 = vunpack.c.l.b16 %v459
        %v590 = vunpack.c.l.b16 %v460
        %v591 = vunpack.c.l.b16 %v461
        %v592 = vunpack.c.l.b16 %v462
        %v593 = vunpack.c.l.b16 %v463
        %v594 = vunpack.c.l.b16 %v464
        %v595 = vunpack.c.l.b16 %v465
        %v596 = vunpack.c.l.b16 %v466
        %v597 = vunpack.c.l.b16 %v467
        %v598 = vunpack.c.l.b16 %v468
        %v599 = vunpack.c.l.b16 %v469
        %v600 = vunpack.c.l.b16 %v470
        %v601 = vunpack.c.l.b16 %v471
        %v602 = vunpack.c.l.b16 %v472
        %v603 = vunpack.c.l.b16 %v473
        %v604 = vunpack.c.l.b16 %v474
        %v605 = vunpack.c.l.b16 %v475
        %v606 = vunpack.c.l.b16 %v476
        %v607 = vunpack.c.l.b16 %v477
        %v608 = vunpack.c.l.b16 %v478
        %v609 = vunpack.c.l.b16 %v479
        %v610 = vunpack.c.l.b16 %v480
        %v611 = vunpack.c.l.b16 %v481
        %v612 = vunpack.c.l.b16 %v482
        %v613 = vunpack.c.l.b16 %v483
        %v614 = vunpack.c.l.b16 %v484
        %v615 = vunpack.c.l.b16 %v485
        %v616 = vunpack.c.l.b16 %v486
        %v617 = vunpack.c.l.b16 %v487
        %v618 = vunpack.c.l.b16 %v488
        %v619 = vunpack.c.l.b16 %v489
        %v620 = vunpack.c.l.b16 %v490
        %v621 = vunpack.c.l.b16 %v491
        %v622 = vunpack.c.l.b16 %v492
        %v623 = vunpack.c.l.b16 %v493
        %v624 = vunpack.c.l.b16 %v494
        %v625 = vunpack.c.l.b16 %v495
        %v626 = vunpack.c.l.b16 %v496
        %v627 = vunpack.c.l.b16 %v497
        %v628 = vunpack.c.l.b16 %v498
        %v629 = vunpack.c.l.b16 %v499
        %v630 = vunpack.c.l.b16 %v500
        %v631 = vunpack.c.l.b16 %v501
        %v632 = vunpack.c.l.b16 %v502
        %v633 = vunpack.c.l.b16 %v503
        %v634 = vunpack.c.l.b16 %v504
        %v635 = vunpack.c.l.b16 %v505
        %v636 = vunpack.c.l.b16 %v506
        %v637 = vunpack.c.l.b16 %v507
        %v638 = vpack.c.b16 %v575, %v574
        %v639 = vpack.c.b16 %v577, %v576
        %v640 = vpack.c.b16 %v579, %v578
        %v641 = vpack.c.b16 %v581, %v580
        %v642 = vpack.c.b16 %v583, %v582
        %v643 = vpack.c.b16 %v585, %v584
        %v644 = vpack.c.b16 %v587, %v586
        %v645 = vpack.c.b16 %v589, %v588
        %v646 = vpack.c.b16 %v591, %v590
        %v647 = vpack.c.b16 %v593, %v592
        %v648 = vpack.c.b16 %v595, %v594
        %v649 = vpack.c.b16 %v597, %v596
        %v650 = vpack.c.b16 %v599, %v598
        %v651 = vpack.c.b16 %v601, %v600
        %v652 = vpack.c.b16 %v603, %v602
        %v653 = vpack.c.b16 %v605, %v604
        %v654 = vpack.c.b16 %v607, %v606
        %v655 = vpack.c.b16 %v609, %v608
        %v656 = vpack.c.b16 %v611, %v610
        %v657 = vpack.c.b16 %v613, %v612
        %v658 = vpack.c.b16 %v615, %v614
        %v659 = vpack.c.b16 %v617, %v616
        %v660 = vpack.c.b16 %v619, %v618
        %v661 = vpack.c.b16 %v621, %v620
        %v662 = vpack.c.b16 %v623, %v622
        %v663 = vpack.c.b16 %v625, %v624
        %v664 = vpack.c.b16 %v627, %v626
        %v665 = vpack.c.b16 %v629, %v628
        %v666 = vpack.c.b16 %v631, %v630
        %v667 = vpack.c.b16 %v633, %v632
        %v668 = vpack.c.b16 %v635, %v634
        %v669 = vpack.c.b16 %v637, %v636
        %v672 = vunpack.c.l.b16 %v508
        %v673 = vunpack.c.l.b16 %v509
        %v674 = vpack.c.b16 %v673, %v672
        %vm676 = vcmask 130048
        %v678 = vsel %vm676, %v638, 0
        %v681 = vsel %vm676, %v639, 0
        %v684 = vsel %vm676, %v640, 0
        %v687 = vsel %vm676, %v641, 0
        %v690 = vsel %vm676, %v642, 0
        %v693 = vsel %vm676, %v643, 0
        %v696 = vsel %vm676, %v644, 0
        %v699 = vsel %vm676, %v645, 0
        %v702 = vsel %vm676, %v646, 0
        %v705 = vsel %vm676, %v647, 0
        %v708 = vsel %vm676, %v648, 0
        %v711 = vsel %vm676, %v649, 0
        %v714 = vsel %vm676, %v650, 0
        %v717 = vsel %vm676, %v651, 0
        %v720 = vsel %vm676, %v652, 0
        %v723 = vsel %vm676, %v653, 0
        %v726 = vsel %vm676, %v654, 0
        %v729 = vsel %vm676, %v655, 0
        %v732 = vsel %vm676, %v656, 0
        %v735 = vsel %vm676, %v657, 0
        %v738 = vsel %vm676, %v658, 0
        %v741 = vsel %vm676, %v659, 0
        %v744 = vsel %vm676, %v660, 0
        %v747 = vsel %vm676, %v661, 0
        %v750 = vsel %vm676, %v662, 0
        %v753 = vsel %vm676, %v663, 0
        %v756 = vsel %vm676, %v664, 0
        %v759 = vsel %vm676, %v665, 0
        %v762 = vsel %vm676, %v666, 0
        %v765 = vsel %vm676, %v667, 0
        %v768 = vsel %vm676, %v668, 0
        %v771 = vsel %vm676, %v669, 0
        %773 = vmatprep.subr.bf16.mxu0 0
        %774 = vmatpush1.bf16.msra.mxu0 %v674
        %775 = vmatprep.subr.bf16.mxu0 0
        %776 = vmatpush1.bf16.msra.mxu0 0
        %777 = vmatprep.subr.bf16.mxu0 0
        %778 = vmatpush1.bf16.msra.mxu0 0
        %779 = vmatprep.subr.bf16.mxu0 0
        %780 = vmatpush1.bf16.msra.mxu0 0
        %781 = vmatprep.subr.bf16.mxu0 0
        %782 = vmatpush1.bf16.msra.mxu0 0
        %783 = vmatprep.subr.bf16.mxu0 0
        %784 = vmatpush1.bf16.msra.mxu0 0
        %785 = vmatprep.subr.bf16.mxu0 0
        %786 = vmatpush1.bf16.msra.mxu0 0
        %787 = vmatprep.subr.bf16.mxu0 0
        %788 = vmatpush1.bf16.msra.mxu0 0
        %789 = vmatprep.subr.bf16.mxu0 0
        %790 = vmatpush1.bf16.msra.mxu0 0
        %791 = vmatprep.subr.bf16.mxu0 0
        %792 = vmatpush1.bf16.msra.mxu0 0
        %793 = vmatprep.subr.bf16.mxu0 0
        %794 = vmatpush1.bf16.msra.mxu0 0
        %795 = vmatprep.subr.bf16.mxu0 0
        %796 = vmatpush1.bf16.msra.mxu0 0
        %797 = vmatprep.subr.bf16.mxu0 0
        %798 = vmatpush1.bf16.msra.mxu0 0
        %799 = vmatprep.subr.bf16.mxu0 0
        %800 = vmatpush1.bf16.msra.mxu0 0
        %801 = vmatprep.subr.bf16.mxu0 0
        %802 = vmatpush1.bf16.msra.mxu0 0
        %803 = vmatprep.subr.bf16.mxu0 0
        %804 = vmatpush1.bf16.msra.mxu0 0
        %805 = vmatprep.mubr.bf16.mxu0 0
        %806 = vmatmul.mubr.bf16.gmra.mrb[0].mxu0 %v678
        %v807 = vpop.f32.mrb[0].mxu0
        %v808 = vadd.f32 0.0, %v807
        %v809 = vpop.f32.mrb[0].mxu0
        %v810 = vpop.f32.mrb[0].mxu0
        %v811 = vadd.f32 0.0, %v810
        %v812 = vpop.f32.mrb[0].mxu0
        %813 = vmatprep.mubr.bf16.mxu0 0
        %814 = vmatmul.mubr.bf16.gmra.mrb[0].mxu0 %v681
        %v815 = vpop.f32.mrb[0].mxu0
        %v816 = vadd.f32 0.0, %v815
        %v817 = vpop.f32.mrb[0].mxu0
        %v818 = vpop.f32.mrb[0].mxu0
        %v819 = vadd.f32 0.0, %v818
        %v820 = vpop.f32.mrb[0].mxu0
        %821 = vmatprep.mubr.bf16.mxu0 0
        %822 = vmatmul.mubr.bf16.gmra.mrb[0].mxu0 %v684
        %v823 = vpop.f32.mrb[0].mxu0
        %v824 = vadd.f32 0.0, %v823
        %v825 = vpop.f32.mrb[0].mxu0
        %v826 = vpop.f32.mrb[0].mxu0
        %v827 = vadd.f32 0.0, %v826
        %v828 = vpop.f32.mrb[0].mxu0
        %829 = vmatprep.mubr.bf16.mxu0 0
        %830 = vmatmul.mubr.bf16.gmra.mrb[0].mxu0 %v687
        %v831 = vpop.f32.mrb[0].mxu0
        %v832 = vadd.f32 0.0, %v831
        %v833 = vpop.f32.mrb[0].mxu0
        %v834 = vpop.f32.mrb[0].mxu0
        %v835 = vadd.f32 0.0, %v834
        %v836 = vpop.f32.mrb[0].mxu0
        %837 = vmatprep.mubr.bf16.mxu0 0
        %838 = vmatmul.mubr.bf16.gmra.mrb[0].mxu0 %v690
        %v839 = vpop.f32.mrb[0].mxu0
        %v840 = vadd.f32 0.0, %v839
        %v841 = vpop.f32.mrb[0].mxu0
        %v842 = vpop.f32.mrb[0].mxu0
        %v843 = vadd.f32 0.0, %v842
        %v844 = vpop.f32.mrb[0].mxu0
        %845 = vmatprep.mubr.bf16.mxu0 0
        %846 = vmatmul.mubr.bf16.gmra.mrb[0].mxu0 %v693
        %v847 = vpop.f32.mrb[0].mxu0
        %v848 = vadd.f32 0.0, %v847
        %v849 = vpop.f32.mrb[0].mxu0
        %v850 = vpop.f32.mrb[0].mxu0
        %v851 = vadd.f32 0.0, %v850
        %v852 = vpop.f32.mrb[0].mxu0
        %853 = vmatprep.mubr.bf16.mxu0 0
        %854 = vmatmul.mubr.bf16.gmra.mrb[0].mxu0 %v696
        %v855 = vpop.f32.mrb[0].mxu0
        %v856 = vadd.f32 0.0, %v855
        %v857 = vpop.f32.mrb[0].mxu0
        %v858 = vpop.f32.mrb[0].mxu0
        %v859 = vadd.f32 0.0, %v858
        %v860 = vpop.f32.mrb[0].mxu0
        %861 = vmatprep.mubr.bf16.mxu0 0
        %862 = vmatmul.mubr.bf16.gmra.mrb[0].mxu0 %v699
        %v863 = vpop.f32.mrb[0].mxu0
        %v864 = vadd.f32 0.0, %v863
        %v865 = vpop.f32.mrb[0].mxu0
        %v866 = vpop.f32.mrb[0].mxu0
        %v867 = vadd.f32 0.0, %v866
        %v868 = vpop.f32.mrb[0].mxu0
        %869 = vmatprep.mubr.bf16.mxu0 0
        %870 = vmatmul.mubr.bf16.gmra.mrb[0].mxu0 %v702
        %v871 = vpop.f32.mrb[0].mxu0
        %v872 = vadd.f32 0.0, %v871
        %v873 = vpop.f32.mrb[0].mxu0
        %v874 = vpop.f32.mrb[0].mxu0
        %v875 = vadd.f32 0.0, %v874
        %v876 = vpop.f32.mrb[0].mxu0
        %877 = vmatprep.mubr.bf16.mxu0 0
        %878 = vmatmul.mubr.bf16.gmra.mrb[0].mxu0 %v705
        %v879 = vpop.f32.mrb[0].mxu0
        %v880 = vadd.f32 0.0, %v879
        %v881 = vpop.f32.mrb[0].mxu0
        %v882 = vpop.f32.mrb[0].mxu0
        %v883 = vadd.f32 0.0, %v882
        %v884 = vpop.f32.mrb[0].mxu0
        %885 = vmatprep.mubr.bf16.mxu0 0
        %886 = vmatmul.mubr.bf16.gmra.mrb[0].mxu0 %v708
        %v887 = vpop.f32.mrb[0].mxu0
        %v888 = vadd.f32 0.0, %v887
        %v889 = vpop.f32.mrb[0].mxu0
        %v890 = vpop.f32.mrb[0].mxu0
        %v891 = vadd.f32 0.0, %v890
        %v892 = vpop.f32.mrb[0].mxu0
        %893 = vmatprep.mubr.bf16.mxu0 0
        %894 = vmatmul.mubr.bf16.gmra.mrb[0].mxu0 %v711
        %v895 = vpop.f32.mrb[0].mxu0
        %v896 = vadd.f32 0.0, %v895
        %v897 = vpop.f32.mrb[0].mxu0
        %v898 = vpop.f32.mrb[0].mxu0
        %v899 = vadd.f32 0.0, %v898
        %v900 = vpop.f32.mrb[0].mxu0
        %901 = vmatprep.mubr.bf16.mxu0 0
        %902 = vmatmul.mubr.bf16.gmra.mrb[0].mxu0 %v714
        %v903 = vpop.f32.mrb[0].mxu0
        %v904 = vadd.f32 0.0, %v903
        %v905 = vpop.f32.mrb[0].mxu0
        %v906 = vpop.f32.mrb[0].mxu0
        %v907 = vadd.f32 0.0, %v906
        %v908 = vpop.f32.mrb[0].mxu0
        %909 = vmatprep.mubr.bf16.mxu0 0
        %910 = vmatmul.mubr.bf16.gmra.mrb[0].mxu0 %v717
        %v911 = vpop.f32.mrb[0].mxu0
        %v912 = vadd.f32 0.0, %v911
        %v913 = vpop.f32.mrb[0].mxu0
        %v914 = vpop.f32.mrb[0].mxu0
        %v915 = vadd.f32 0.0, %v914
        %v916 = vpop.f32.mrb[0].mxu0
        %917 = vmatprep.mubr.bf16.mxu0 0
        %918 = vmatmul.mubr.bf16.gmra.mrb[0].mxu0 %v720
        %v919 = vpop.f32.mrb[0].mxu0
        %v920 = vadd.f32 0.0, %v919
        %v921 = vpop.f32.mrb[0].mxu0
        %v922 = vpop.f32.mrb[0].mxu0
        %v923 = vadd.f32 0.0, %v922
        %v924 = vpop.f32.mrb[0].mxu0
        %925 = vmatprep.mubr.bf16.mxu0 0
        %926 = vmatmul.mubr.bf16.gmra.mrb[0].mxu0 %v723
        %v927 = vpop.f32.mrb[0].mxu0
        %v928 = vadd.f32 0.0, %v927
        %v929 = vpop.f32.mrb[0].mxu0
        %v930 = vpop.f32.mrb[0].mxu0
        %v931 = vadd.f32 0.0, %v930
        %v932 = vpop.f32.mrb[0].mxu0
        %933 = vmatprep.mubr.bf16.mxu0 0
        %934 = vmatmul.mubr.bf16.gmra.mrb[0].mxu0 %v726
        %v935 = vpop.f32.mrb[0].mxu0
        %v936 = vadd.f32 0.0, %v935
        %v937 = vpop.f32.mrb[0].mxu0
        %v938 = vpop.f32.mrb[0].mxu0
        %v939 = vadd.f32 0.0, %v938
        %v940 = vpop.f32.mrb[0].mxu0
        %941 = vmatprep.mubr.bf16.mxu0 0
        %942 = vmatmul.mubr.bf16.gmra.mrb[0].mxu0 %v729
        %v943 = vpop.f32.mrb[0].mxu0
        %v944 = vadd.f32 0.0, %v943
        %v945 = vpop.f32.mrb[0].mxu0
        %v946 = vpop.f32.mrb[0].mxu0
        %v947 = vadd.f32 0.0, %v946
        %v948 = vpop.f32.mrb[0].mxu0
        %949 = vmatprep.mubr.bf16.mxu0 0
        %950 = vmatmul.mubr.bf16.gmra.mrb[0].mxu0 %v732
        %v951 = vpop.f32.mrb[0].mxu0
        %v952 = vadd.f32 0.0, %v951
        %v953 = vpop.f32.mrb[0].mxu0
        %v954 = vpop.f32.mrb[0].mxu0
        %v955 = vadd.f32 0.0, %v954
        %v956 = vpop.f32.mrb[0].mxu0
        %957 = vmatprep.mubr.bf16.mxu0 0
        %958 = vmatmul.mubr.bf16.gmra.mrb[0].mxu0 %v735
        %v959 = vpop.f32.mrb[0].mxu0
        %v960 = vadd.f32 0.0, %v959
        %v961 = vpop.f32.mrb[0].mxu0
        %v962 = vpop.f32.mrb[0].mxu0
        %v963 = vadd.f32 0.0, %v962
        %v964 = vpop.f32.mrb[0].mxu0
        %965 = vmatprep.mubr.bf16.mxu0 0
        %966 = vmatmul.mubr.bf16.gmra.mrb[0].mxu0 %v738
        %v967 = vpop.f32.mrb[0].mxu0
        %v968 = vadd.f32 0.0, %v967
        %v969 = vpop.f32.mrb[0].mxu0
        %v970 = vpop.f32.mrb[0].mxu0
        %v971 = vadd.f32 0.0, %v970
        %v972 = vpop.f32.mrb[0].mxu0
        %973 = vmatprep.mubr.bf16.mxu0 0
        %974 = vmatmul.mubr.bf16.gmra.mrb[0].mxu0 %v741
        %v975 = vpop.f32.mrb[0].mxu0
        %v976 = vadd.f32 0.0, %v975
        %v977 = vpop.f32.mrb[0].mxu0
        %v978 = vpop.f32.mrb[0].mxu0
        %v979 = vadd.f32 0.0, %v978
        %v980 = vpop.f32.mrb[0].mxu0
        %981 = vmatprep.mubr.bf16.mxu0 0
        %982 = vmatmul.mubr.bf16.gmra.mrb[0].mxu0 %v744
        %v983 = vpop.f32.mrb[0].mxu0
        %v984 = vadd.f32 0.0, %v983
        %v985 = vpop.f32.mrb[0].mxu0
        %v986 = vpop.f32.mrb[0].mxu0
        %v987 = vadd.f32 0.0, %v986
        %v988 = vpop.f32.mrb[0].mxu0
        %989 = vmatprep.mubr.bf16.mxu0 0
        %990 = vmatmul.mubr.bf16.gmra.mrb[0].mxu0 %v747
        %v991 = vpop.f32.mrb[0].mxu0
        %v992 = vadd.f32 0.0, %v991
        %v993 = vpop.f32.mrb[0].mxu0
        %v994 = vpop.f32.mrb[0].mxu0
        %v995 = vadd.f32 0.0, %v994
        %v996 = vpop.f32.mrb[0].mxu0
        %997 = vmatprep.mubr.bf16.mxu0 0
        %998 = vmatmul.mubr.bf16.gmra.mrb[0].mxu0 %v750
        %v999 = vpop.f32.mrb[0].mxu0
        %v1000 = vadd.f32 0.0, %v999
        %v1001 = vpop.f32.mrb[0].mxu0
        %v1002 = vpop.f32.mrb[0].mxu0
        %v1003 = vadd.f32 0.0, %v1002
        %v1004 = vpop.f32.mrb[0].mxu0
        %1005 = vmatprep.mubr.bf16.mxu0 0
        %1006 = vmatmul.mubr.bf16.gmra.mrb[0].mxu0 %v753
        %v1007 = vpop.f32.mrb[0].mxu0
        %v1008 = vadd.f32 0.0, %v1007
        %v1009 = vpop.f32.mrb[0].mxu0
        %v1010 = vpop.f32.mrb[0].mxu0
        %v1011 = vadd.f32 0.0, %v1010
        %v1012 = vpop.f32.mrb[0].mxu0
        %1013 = vmatprep.mubr.bf16.mxu0 0
        %1014 = vmatmul.mubr.bf16.gmra.mrb[0].mxu0 %v756
        %v1015 = vpop.f32.mrb[0].mxu0
        %v1016 = vadd.f32 0.0, %v1015
        %v1017 = vpop.f32.mrb[0].mxu0
        %v1018 = vpop.f32.mrb[0].mxu0
        %v1019 = vadd.f32 0.0, %v1018
        %v1020 = vpop.f32.mrb[0].mxu0
        %1021 = vmatprep.mubr.bf16.mxu0 0
        %1022 = vmatmul.mubr.bf16.gmra.mrb[0].mxu0 %v759
        %v1023 = vpop.f32.mrb[0].mxu0
        %v1024 = vadd.f32 0.0, %v1023
        %v1025 = vpop.f32.mrb[0].mxu0
        %v1026 = vpop.f32.mrb[0].mxu0
        %v1027 = vadd.f32 0.0, %v1026
        %v1028 = vpop.f32.mrb[0].mxu0
        %1029 = vmatprep.mubr.bf16.mxu0 0
        %1030 = vmatmul.mubr.bf16.gmra.mrb[0].mxu0 %v762
        %v1031 = vpop.f32.mrb[0].mxu0
        %v1032 = vadd.f32 0.0, %v1031
        %v1033 = vpop.f32.mrb[0].mxu0
        %v1034 = vpop.f32.mrb[0].mxu0
        %v1035 = vadd.f32 0.0, %v1034
        %v1036 = vpop.f32.mrb[0].mxu0
        %1037 = vmatprep.mubr.bf16.mxu0 0
        %1038 = vmatmul.mubr.bf16.gmra.mrb[0].mxu0 %v765
        %v1039 = vpop.f32.mrb[0].mxu0
        %v1040 = vadd.f32 0.0, %v1039
        %v1041 = vpop.f32.mrb[0].mxu0
        %v1042 = vpop.f32.mrb[0].mxu0
        %v1043 = vadd.f32 0.0, %v1042
        %v1044 = vpop.f32.mrb[0].mxu0
        %1045 = vmatprep.mubr.bf16.mxu0 0
        %1046 = vmatmul.mubr.bf16.gmra.mrb[0].mxu0 %v768
        %v1047 = vpop.f32.mrb[0].mxu0
        %v1048 = vadd.f32 0.0, %v1047
        %v1049 = vpop.f32.mrb[0].mxu0
        %v1050 = vpop.f32.mrb[0].mxu0
        %v1051 = vadd.f32 0.0, %v1050
        %v1052 = vpop.f32.mrb[0].mxu0
        %1053 = vmatprep.mubr.bf16.mxu0 0
        %1054 = vmatmul.mubr.bf16.gmra.mrb[0].mxu0 %v771
        %v1055 = vpop.f32.mrb[0].mxu0
        %v1056 = vadd.f32 0.0, %v1055
        %v1057 = vpop.f32.mrb[0].mxu0
        %v1058 = vpop.f32.mrb[0].mxu0
        %v1059 = vadd.f32 0.0, %v1058
        %v1060 = vpop.f32.mrb[0].mxu0
        %1061 = vdwg.mxu0
        %v1062 = vadd.f32 %v380, %v808
        %v1063 = vadd.f32 %v381, %v811
        %v1064 = vadd.f32 %v382, %v816
        %v1065 = vadd.f32 %v383, %v819
        %v1066 = vadd.f32 %v384, %v824
        %v1067 = vadd.f32 %v385, %v827
        %v1068 = vadd.f32 %v386, %v832
        %v1069 = vadd.f32 %v387, %v835
        %v1070 = vadd.f32 %v388, %v840
        %v1071 = vadd.f32 %v389, %v843
        %v1072 = vadd.f32 %v390, %v848
        %v1073 = vadd.f32 %v391, %v851
        %v1074 = vadd.f32 %v392, %v856
        %v1075 = vadd.f32 %v393, %v859
        %v1076 = vadd.f32 %v394, %v864
        %v1077 = vadd.f32 %v395, %v867
        %v1078 = vadd.f32 %v396, %v872
        %v1079 = vadd.f32 %v397, %v875
        %v1080 = vadd.f32 %v398, %v880
        %v1081 = vadd.f32 %v399, %v883
        %v1082 = vadd.f32 %v400, %v888
        %v1083 = vadd.f32 %v401, %v891
        %v1084 = vadd.f32 %v402, %v896
        %v1085 = vadd.f32 %v403, %v899
        %v1086 = vadd.f32 %v404, %v904
        %v1087 = vadd.f32 %v405, %v907
        %v1088 = vadd.f32 %v406, %v912
        %v1089 = vadd.f32 %v407, %v915
        %v1090 = vadd.f32 %v408, %v920
        %v1091 = vadd.f32 %v409, %v923
        %v1092 = vadd.f32 %v410, %v928
        %v1093 = vadd.f32 %v411, %v931
        %v1094 = vadd.f32 %v412, %v936
        %v1095 = vadd.f32 %v413, %v939
        %v1096 = vadd.f32 %v414, %v944
        %v1097 = vadd.f32 %v415, %v947
        %v1098 = vadd.f32 %v416, %v952
        %v1099 = vadd.f32 %v417, %v955
        %v1100 = vadd.f32 %v418, %v960
        %v1101 = vadd.f32 %v419, %v963
        %v1102 = vadd.f32 %v420, %v968
        %v1103 = vadd.f32 %v421, %v971
        %v1104 = vadd.f32 %v422, %v976
        %v1105 = vadd.f32 %v423, %v979
        %v1106 = vadd.f32 %v424, %v984
        %v1107 = vadd.f32 %v425, %v987
        %v1108 = vadd.f32 %v426, %v992
        %v1109 = vadd.f32 %v427, %v995
        %v1110 = vadd.f32 %v428, %v1000
        %v1111 = vadd.f32 %v429, %v1003
        %v1112 = vadd.f32 %v430, %v1008
        %v1113 = vadd.f32 %v431, %v1011
        %v1114 = vadd.f32 %v432, %v1016
        %v1115 = vadd.f32 %v433, %v1019
        %v1116 = vadd.f32 %v434, %v1024
        %v1117 = vadd.f32 %v435, %v1027
        %v1118 = vadd.f32 %v436, %v1032
        %v1119 = vadd.f32 %v437, %v1035
        %v1120 = vadd.f32 %v438, %v1040
        %v1121 = vadd.f32 %v439, %v1043
        %v1122 = vadd.f32 %v440, %v1048
        %v1123 = vadd.f32 %v441, %v1051
        %v1124 = vadd.f32 %v442, %v1056
        %v1125 = vadd.f32 %v443, %v1059
        %1126 = vst [vmem:[#allocation2] sm:$0xff] %v1062
        %1127 = vst [vmem:[#allocation2 + $0x8] sm:$0xff] %v1063
        %1128 = vst [vmem:[#allocation2 + $0x10] sm:$0xff] %v1064
        %1129 = vst [vmem:[#allocation2 + $0x18] sm:$0xff] %v1065
        %1130 = vst [vmem:[#allocation2 + $0x20] sm:$0xff] %v1066
        %1131 = vst [vmem:[#allocation2 + $0x28] sm:$0xff] %v1067
        %1132 = vst [vmem:[#allocation2 + $0x30] sm:$0xff] %v1068
        %1133 = vst [vmem:[#allocation2 + $0x38] sm:$0xff] %v1069
        %1134 = vst [vmem:[#allocation2 + $0x40] sm:$0xff] %v1070
        %1135 = vst [vmem:[#allocation2 + $0x48] sm:$0xff] %v1071
        %1136 = vst [vmem:[#allocation2 + $0x50] sm:$0xff] %v1072
        %1137 = vst [vmem:[#allocation2 + $0x58] sm:$0xff] %v1073
        %1138 = vst [vmem:[#allocation2 + $0x60] sm:$0xff] %v1074
        %1139 = vst [vmem:[#allocation2 + $0x68] sm:$0xff] %v1075
        %1140 = vst [vmem:[#allocation2 + $0x70] sm:$0xff] %v1076
        %1141 = vst [vmem:[#allocation2 + $0x78] sm:$0xff] %v1077
        %1142 = vst [vmem:[#allocation2 + $0x80] sm:$0xff] %v1078
        %1143 = vst [vmem:[#allocation2 + $0x88] sm:$0xff] %v1079
        %1144 = vst [vmem:[#allocation2 + $0x90] sm:$0xff] %v1080
        %1145 = vst [vmem:[#allocation2 + $0x98] sm:$0xff] %v1081
        %1146 = vst [vmem:[#allocation2 + $0xa0] sm:$0xff] %v1082
        %1147 = vst [vmem:[#allocation2 + $0xa8] sm:$0xff] %v1083
        %1148 = vst [vmem:[#allocation2 + $0xb0] sm:$0xff] %v1084
        %1149 = vst [vmem:[#allocation2 + $0xb8] sm:$0xff] %v1085
        %1150 = vst [vmem:[#allocation2 + $0xc0] sm:$0xff] %v1086
        %1151 = vst [vmem:[#allocation2 + $0xc8] sm:$0xff] %v1087
        %1152 = vst [vmem:[#allocation2 + $0xd0] sm:$0xff] %v1088
        %1153 = vst [vmem:[#allocation2 + $0xd8] sm:$0xff] %v1089
        %1154 = vst [vmem:[#allocation2 + $0xe0] sm:$0xff] %v1090
        %1155 = vst [vmem:[#allocation2 + $0xe8] sm:$0xff] %v1091
        %1156 = vst [vmem:[#allocation2 + $0xf0] sm:$0xff] %v1092
        %1157 = vst [vmem:[#allocation2 + $0xf8] sm:$0xff] %v1093
        %1158 = vst [vmem:[#allocation2 + $0x100] sm:$0xff] %v1094
        %1159 = vst [vmem:[#allocation2 + $0x108] sm:$0xff] %v1095
        %1160 = vst [vmem:[#allocation2 + $0x110] sm:$0xff] %v1096
        %1161 = vst [vmem:[#allocation2 + $0x118] sm:$0xff] %v1097
        %1162 = vst [vmem:[#allocation2 + $0x120] sm:$0xff] %v1098
        %1163 = vst [vmem:[#allocation2 + $0x128] sm:$0xff] %v1099
        %1164 = vst [vmem:[#allocation2 + $0x130] sm:$0xff] %v1100
        %1165 = vst [vmem:[#allocation2 + $0x138] sm:$0xff] %v1101
        %1166 = vst [vmem:[#allocation2 + $0x140] sm:$0xff] %v1102
        %1167 = vst [vmem:[#allocation2 + $0x148] sm:$0xff] %v1103
        %1168 = vst [vmem:[#allocation2 + $0x150] sm:$0xff] %v1104
        %1169 = vst [vmem:[#allocation2 + $0x158] sm:$0xff] %v1105
        %1170 = vst [vmem:[#allocation2 + $0x160] sm:$0xff] %v1106
        %1171 = vst [vmem:[#allocation2 + $0x168] sm:$0xff] %v1107
        %1172 = vst [vmem:[#allocation2 + $0x170] sm:$0xff] %v1108
        %1173 = vst [vmem:[#allocation2 + $0x178] sm:$0xff] %v1109
        %1174 = vst [vmem:[#allocation2 + $0x180] sm:$0xff] %v1110
        %1175 = vst [vmem:[#allocation2 + $0x188] sm:$0xff] %v1111
        %1176 = vst [vmem:[#allocation2 + $0x190] sm:$0xff] %v1112
        %1177 = vst [vmem:[#allocation2 + $0x198] sm:$0xff] %v1113
        %1178 = vst [vmem:[#allocation2 + $0x1a0] sm:$0xff] %v1114
        %1179 = vst [vmem:[#allocation2 + $0x1a8] sm:$0xff] %v1115
        %1180 = vst [vmem:[#allocation2 + $0x1b0] sm:$0xff] %v1116
        %1181 = vst [vmem:[#allocation2 + $0x1b8] sm:$0xff] %v1117
        %1182 = vst [vmem:[#allocation2 + $0x1c0] sm:$0xff] %v1118
        %1183 = vst [vmem:[#allocation2 + $0x1c8] sm:$0xff] %v1119
        %1184 = vst [vmem:[#allocation2 + $0x1d0] sm:$0xff] %v1120
        %1185 = vst [vmem:[#allocation2 + $0x1d8] sm:$0xff] %v1121
        %1186 = vst [vmem:[#allocation2 + $0x1e0] sm:$0xff] %v1122
        %1187 = vst [vmem:[#allocation2 + $0x1e8] sm:$0xff] %v1123
        %1188 = vst [vmem:[#allocation2 + $0x1f0] sm:$0xff] %v1124
        %1189 = vst [vmem:[#allocation2 + $0x1f8] sm:$0xff] %v1125
        // Predicated region
        $region41: #{conv_transpose2d_block.1} parent=27 // pred_check
          %p1190 = pneg %p312
        $region42: #{conv_transpose2d_block.1} parent=27 // pred_check_branch
          %1192 = sbr.rel (%p1190) target = $region44
        $region43: #{conv_transpose2d_block.1} parent=27 // pred_region
          %v1193 = vld [vmem:[#allocation2] sm:$0xff]
          %v1194 = vld [vmem:[#allocation2 + $0x8] sm:$0xff]
          %v1195 = vld [vmem:[#allocation2 + $0x10] sm:$0xff]
          %v1196 = vld [vmem:[#allocation2 + $0x18] sm:$0xff]
          %v1197 = vld [vmem:[#allocation2 + $0x20] sm:$0xff]
          %v1198 = vld [vmem:[#allocation2 + $0x28] sm:$0xff]
          %v1199 = vld [vmem:[#allocation2 + $0x30] sm:$0xff]
          %v1200 = vld [vmem:[#allocation2 + $0x38] sm:$0xff]
          %v1201 = vld [vmem:[#allocation2 + $0x40] sm:$0xff]
          %v1202 = vld [vmem:[#allocation2 + $0x48] sm:$0xff]
          %v1203 = vld [vmem:[#allocation2 + $0x50] sm:$0xff]
          %v1204 = vld [vmem:[#allocation2 + $0x58] sm:$0xff]
          %v1205 = vld [vmem:[#allocation2 + $0x60] sm:$0xff]
          %v1206 = vld [vmem:[#allocation2 + $0x68] sm:$0xff]
          %v1207 = vld [vmem:[#allocation2 + $0x70] sm:$0xff]
          %v1208 = vld [vmem:[#allocation2 + $0x78] sm:$0xff]
          %v1209 = vld [vmem:[#allocation2 + $0x80] sm:$0xff]
          %v1210 = vld [vmem:[#allocation2 + $0x88] sm:$0xff]
          %v1211 = vld [vmem:[#allocation2 + $0x90] sm:$0xff]
          %v1212 = vld [vmem:[#allocation2 + $0x98] sm:$0xff]
          %v1213 = vld [vmem:[#allocation2 + $0xa0] sm:$0xff]
          %v1214 = vld [vmem:[#allocation2 + $0xa8] sm:$0xff]
          %v1215 = vld [vmem:[#allocation2 + $0xb0] sm:$0xff]
          %v1216 = vld [vmem:[#allocation2 + $0xb8] sm:$0xff]
          %v1217 = vld [vmem:[#allocation2 + $0xc0] sm:$0xff]
          %v1218 = vld [vmem:[#allocation2 + $0xc8] sm:$0xff]
          %v1219 = vld [vmem:[#allocation2 + $0xd0] sm:$0xff]
          %v1220 = vld [vmem:[#allocation2 + $0xd8] sm:$0xff]
          %v1221 = vld [vmem:[#allocation2 + $0xe0] sm:$0xff]
          %v1222 = vld [vmem:[#allocation2 + $0xe8] sm:$0xff]
          %v1223 = vld [vmem:[#allocation2 + $0xf0] sm:$0xff]
          %v1224 = vld [vmem:[#allocation2 + $0xf8] sm:$0xff]
          %v1225 = vld [vmem:[#allocation2 + $0x100] sm:$0xff]
          %v1226 = vld [vmem:[#allocation2 + $0x108] sm:$0xff]
          %v1227 = vld [vmem:[#allocation2 + $0x110] sm:$0xff]
          %v1228 = vld [vmem:[#allocation2 + $0x118] sm:$0xff]
          %v1229 = vld [vmem:[#allocation2 + $0x120] sm:$0xff]
          %v1230 = vld [vmem:[#allocation2 + $0x128] sm:$0xff]
          %v1231 = vld [vmem:[#allocation2 + $0x130] sm:$0xff]
          %v1232 = vld [vmem:[#allocation2 + $0x138] sm:$0xff]
          %v1233 = vld [vmem:[#allocation2 + $0x140] sm:$0xff]
          %v1234 = vld [vmem:[#allocation2 + $0x148] sm:$0xff]
          %v1235 = vld [vmem:[#allocation2 + $0x150] sm:$0xff]
          %v1236 = vld [vmem:[#allocation2 + $0x158] sm:$0xff]
          %v1237 = vld [vmem:[#allocation2 + $0x160] sm:$0xff]
          %v1238 = vld [vmem:[#allocation2 + $0x168] sm:$0xff]
          %v1239 = vld [vmem:[#allocation2 + $0x170] sm:$0xff]
          %v1240 = vld [vmem:[#allocation2 + $0x178] sm:$0xff]
          %v1241 = vld [vmem:[#allocation2 + $0x180] sm:$0xff]
          %v1242 = vld [vmem:[#allocation2 + $0x188] sm:$0xff]
          %v1243 = vld [vmem:[#allocation2 + $0x190] sm:$0xff]
          %v1244 = vld [vmem:[#allocation2 + $0x198] sm:$0xff]
          %v1245 = vld [vmem:[#allocation2 + $0x1a0] sm:$0xff]
          %v1246 = vld [vmem:[#allocation2 + $0x1a8] sm:$0xff]
          %v1247 = vld [vmem:[#allocation2 + $0x1b0] sm:$0xff]
          %v1248 = vld [vmem:[#allocation2 + $0x1b8] sm:$0xff]
          %v1249 = vld [vmem:[#allocation2 + $0x1c0] sm:$0xff]
          %v1250 = vld [vmem:[#allocation2 + $0x1c8] sm:$0xff]
          %v1251 = vld [vmem:[#allocation2 + $0x1d0] sm:$0xff]
          %v1252 = vld [vmem:[#allocation2 + $0x1d8] sm:$0xff]
          %v1253 = vld [vmem:[#allocation2 + $0x1e0] sm:$0xff]
          %v1254 = vld [vmem:[#allocation2 + $0x1e8] sm:$0xff]
          %v1255 = vld [vmem:[#allocation2 + $0x1f0] sm:$0xff]
          %v1256 = vld [vmem:[#allocation2 + $0x1f8] sm:$0xff]
          %v1257 = vpack.c.bf16 %v1194, %v1193
          %v1258 = vpack.c.bf16 %v1196, %v1195
          %v1259 = vpack.c.bf16 %v1198, %v1197
          %v1260 = vpack.c.bf16 %v1200, %v1199
          %v1261 = vpack.c.bf16 %v1202, %v1201
          %v1262 = vpack.c.bf16 %v1204, %v1203
          %v1263 = vpack.c.bf16 %v1206, %v1205
          %v1264 = vpack.c.bf16 %v1208, %v1207
          %v1265 = vpack.c.bf16 %v1210, %v1209
          %v1266 = vpack.c.bf16 %v1212, %v1211
          %v1267 = vpack.c.bf16 %v1214, %v1213
          %v1268 = vpack.c.bf16 %v1216, %v1215
          %v1269 = vpack.c.bf16 %v1218, %v1217
          %v1270 = vpack.c.bf16 %v1220, %v1219
          %v1271 = vpack.c.bf16 %v1222, %v1221
          %v1272 = vpack.c.bf16 %v1224, %v1223
          %v1273 = vpack.c.bf16 %v1226, %v1225
          %v1274 = vpack.c.bf16 %v1228, %v1227
          %v1275 = vpack.c.bf16 %v1230, %v1229
          %v1276 = vpack.c.bf16 %v1232, %v1231
          %v1277 = vpack.c.bf16 %v1234, %v1233
          %v1278 = vpack.c.bf16 %v1236, %v1235
          %v1279 = vpack.c.bf16 %v1238, %v1237
          %v1280 = vpack.c.bf16 %v1240, %v1239
          %v1281 = vpack.c.bf16 %v1242, %v1241
          %v1282 = vpack.c.bf16 %v1244, %v1243
          %v1283 = vpack.c.bf16 %v1246, %v1245
          %v1284 = vpack.c.bf16 %v1248, %v1247
          %v1285 = vpack.c.bf16 %v1250, %v1249
          %v1286 = vpack.c.bf16 %v1252, %v1251
          %v1287 = vpack.c.bf16 %v1254, %v1253
          %v1288 = vpack.c.bf16 %v1256, %v1255
          %v1321 = vunpack.c.l.b16 %v1257
          %v1322 = vunpack.c.h.b16 %v1257
          %v1323 = vunpack.c.l.b16 %v1258
          %v1324 = vunpack.c.h.b16 %v1258
          %v1325 = vunpack.c.l.b16 %v1259
          %v1326 = vunpack.c.h.b16 %v1259
          %v1327 = vunpack.c.l.b16 %v1260
          %v1328 = vunpack.c.h.b16 %v1260
          %v1329 = vunpack.c.l.b16 %v1261
          %v1330 = vunpack.c.h.b16 %v1261
          %v1331 = vunpack.c.l.b16 %v1262
          %v1332 = vunpack.c.h.b16 %v1262
          %v1333 = vunpack.c.l.b16 %v1263
          %v1334 = vunpack.c.h.b16 %v1263
          %v1335 = vunpack.c.l.b16 %v1264
          %v1336 = vunpack.c.h.b16 %v1264
          %v1337 = vunpack.c.l.b16 %v1265
          %v1338 = vunpack.c.h.b16 %v1265
          %v1339 = vunpack.c.l.b16 %v1266
          %v1340 = vunpack.c.h.b16 %v1266
          %v1341 = vunpack.c.l.b16 %v1267
          %v1342 = vunpack.c.h.b16 %v1267
          %v1343 = vunpack.c.l.b16 %v1268
          %v1344 = vunpack.c.h.b16 %v1268
          %v1345 = vunpack.c.l.b16 %v1269
          %v1346 = vunpack.c.h.b16 %v1269
          %v1347 = vunpack.c.l.b16 %v1270
          %v1348 = vunpack.c.h.b16 %v1270
          %v1349 = vunpack.c.l.b16 %v1271
          %v1350 = vunpack.c.h.b16 %v1271
          %v1351 = vunpack.c.l.b16 %v1272
          %v1352 = vunpack.c.h.b16 %v1272
          %v1353 = vunpack.c.l.b16 %v1273
          %v1354 = vunpack.c.h.b16 %v1273
          %v1355 = vunpack.c.l.b16 %v1274
          %v1356 = vunpack.c.h.b16 %v1274
          %v1357 = vunpack.c.l.b16 %v1275
          %v1358 = vunpack.c.h.b16 %v1275
          %v1359 = vunpack.c.l.b16 %v1276
          %v1360 = vunpack.c.h.b16 %v1276
          %v1361 = vunpack.c.l.b16 %v1277
          %v1362 = vunpack.c.h.b16 %v1277
          %v1363 = vunpack.c.l.b16 %v1278
          %v1364 = vunpack.c.h.b16 %v1278
          %v1365 = vunpack.c.l.b16 %v1279
          %v1366 = vunpack.c.h.b16 %v1279
          %v1367 = vunpack.c.l.b16 %v1280
          %v1368 = vunpack.c.h.b16 %v1280
          %v1369 = vunpack.c.l.b16 %v1281
          %v1370 = vunpack.c.h.b16 %v1281
          %v1371 = vunpack.c.l.b16 %v1282
          %v1372 = vunpack.c.h.b16 %v1282
          %v1373 = vunpack.c.l.b16 %v1283
          %v1374 = vunpack.c.h.b16 %v1283
          %v1375 = vunpack.c.l.b16 %v1284
          %v1376 = vunpack.c.h.b16 %v1284
          %v1377 = vunpack.c.l.b16 %v1285
          %v1378 = vunpack.c.h.b16 %v1285
          %v1379 = vunpack.c.l.b16 %v1286
          %v1380 = vunpack.c.h.b16 %v1286
          %v1381 = vunpack.c.l.b16 %v1287
          %v1382 = vunpack.c.h.b16 %v1287
          %v1383 = vunpack.c.l.b16 %v1288
          %v1384 = vunpack.c.h.b16 %v1288
          %v1385 = vpack.c.b16 %v1321, %v1321
          %v1386 = vpack.c.b16 %v1322, %v1322
          %v1387 = vpack.c.b16 %v1323, %v1323
          %v1388 = vpack.c.b16 %v1324, %v1324
          %v1389 = vpack.c.b16 %v1325, %v1325
          %v1390 = vpack.c.b16 %v1326, %v1326
          %v1391 = vpack.c.b16 %v1327, %v1327
          %v1392 = vpack.c.b16 %v1328, %v1328
          %v1393 = vpack.c.b16 %v1329, %v1329
          %v1394 = vpack.c.b16 %v1330, %v1330
          %v1395 = vpack.c.b16 %v1331, %v1331
          %v1396 = vpack.c.b16 %v1332, %v1332
          %v1397 = vpack.c.b16 %v1333, %v1333
          %v1398 = vpack.c.b16 %v1334, %v1334
          %v1399 = vpack.c.b16 %v1335, %v1335
          %v1400 = vpack.c.b16 %v1336, %v1336
          %v1401 = vpack.c.b16 %v1337, %v1337
          %v1402 = vpack.c.b16 %v1338, %v1338
          %v1403 = vpack.c.b16 %v1339, %v1339
          %v1404 = vpack.c.b16 %v1340, %v1340
          %v1405 = vpack.c.b16 %v1341, %v1341
          %v1406 = vpack.c.b16 %v1342, %v1342
          %v1407 = vpack.c.b16 %v1343, %v1343
          %v1408 = vpack.c.b16 %v1344, %v1344
          %v1409 = vpack.c.b16 %v1345, %v1345
          %v1410 = vpack.c.b16 %v1346, %v1346
          %v1411 = vpack.c.b16 %v1347, %v1347
          %v1412 = vpack.c.b16 %v1348, %v1348
          %v1413 = vpack.c.b16 %v1349, %v1349
          %v1414 = vpack.c.b16 %v1350, %v1350
          %v1415 = vpack.c.b16 %v1351, %v1351
          %v1416 = vpack.c.b16 %v1352, %v1352
          %v1417 = vpack.c.b16 %v1353, %v1353
          %v1418 = vpack.c.b16 %v1354, %v1354
          %v1419 = vpack.c.b16 %v1355, %v1355
          %v1420 = vpack.c.b16 %v1356, %v1356
          %v1421 = vpack.c.b16 %v1357, %v1357
          %v1422 = vpack.c.b16 %v1358, %v1358
          %v1423 = vpack.c.b16 %v1359, %v1359
          %v1424 = vpack.c.b16 %v1360, %v1360
          %v1425 = vpack.c.b16 %v1361, %v1361
          %v1426 = vpack.c.b16 %v1362, %v1362
          %v1427 = vpack.c.b16 %v1363, %v1363
          %v1428 = vpack.c.b16 %v1364, %v1364
          %v1429 = vpack.c.b16 %v1365, %v1365
          %v1430 = vpack.c.b16 %v1366, %v1366
          %v1431 = vpack.c.b16 %v1367, %v1367
          %v1432 = vpack.c.b16 %v1368, %v1368
          %v1433 = vpack.c.b16 %v1369, %v1369
          %v1434 = vpack.c.b16 %v1370, %v1370
          %v1435 = vpack.c.b16 %v1371, %v1371
          %v1436 = vpack.c.b16 %v1372, %v1372
          %v1437 = vpack.c.b16 %v1373, %v1373
          %v1438 = vpack.c.b16 %v1374, %v1374
          %v1439 = vpack.c.b16 %v1375, %v1375
          %v1440 = vpack.c.b16 %v1376, %v1376
          %v1441 = vpack.c.b16 %v1377, %v1377
          %v1442 = vpack.c.b16 %v1378, %v1378
          %v1443 = vpack.c.b16 %v1379, %v1379
          %v1444 = vpack.c.b16 %v1380, %v1380
          %v1445 = vpack.c.b16 %v1381, %v1381
          %v1446 = vpack.c.b16 %v1382, %v1382
          %v1447 = vpack.c.b16 %v1383, %v1383
          %v1448 = vpack.c.b16 %v1384, %v1384
          %1513 = vst [vmem:[%s295] sm:$0xf] %v1385
          %1514 = vst [vmem:[%s295 + $0x4] sm:$0xf] %v1386
          %1515 = vst [vmem:[%s295 + $0x8] sm:$0xf] %v1387
          %1516 = vst [vmem:[%s295 + $0xc] sm:$0xf] %v1388
          %1517 = vst [vmem:[%s295 + $0x10] sm:$0xf] %v1389
          %1518 = vst [vmem:[%s295 + $0x14] sm:$0xf] %v1390
          %1519 = vst [vmem:[%s295 + $0x18] sm:$0xf] %v1391
          %1520 = vst [vmem:[%s295 + $0x1c] sm:$0xf] %v1392
          %1521 = vst [vmem:[%s295 + $0x20] sm:$0xf] %v1393
          %1522 = vst [vmem:[%s295 + $0x24] sm:$0xf] %v1394
          %1523 = vst [vmem:[%s295 + $0x28] sm:$0xf] %v1395
          %1524 = vst [vmem:[%s295 + $0x2c] sm:$0xf] %v1396
          %1525 = vst [vmem:[%s295 + $0x30] sm:$0xf] %v1397
          %1526 = vst [vmem:[%s295 + $0x34] sm:$0xf] %v1398
          %1527 = vst [vmem:[%s295 + $0x38] sm:$0xf] %v1399
          %1528 = vst [vmem:[%s295 + $0x3c] sm:$0xf] %v1400
          %1529 = vst [vmem:[%s295 + $0x40] sm:$0xf] %v1401
          %1530 = vst [vmem:[%s295 + $0x44] sm:$0xf] %v1402
          %1531 = vst [vmem:[%s295 + $0x48] sm:$0xf] %v1403
          %1532 = vst [vmem:[%s295 + $0x4c] sm:$0xf] %v1404
          %1533 = vst [vmem:[%s295 + $0x50] sm:$0xf] %v1405
          %1534 = vst [vmem:[%s295 + $0x54] sm:$0xf] %v1406
          %1535 = vst [vmem:[%s295 + $0x58] sm:$0xf] %v1407
          %1536 = vst [vmem:[%s295 + $0x5c] sm:$0xf] %v1408
          %1537 = vst [vmem:[%s295 + $0x60] sm:$0xf] %v1409
          %1538 = vst [vmem:[%s295 + $0x64] sm:$0xf] %v1410
          %1539 = vst [vmem:[%s295 + $0x68] sm:$0xf] %v1411
          %1540 = vst [vmem:[%s295 + $0x6c] sm:$0xf] %v1412
          %1541 = vst [vmem:[%s295 + $0x70] sm:$0xf] %v1413
          %1542 = vst [vmem:[%s295 + $0x74] sm:$0xf] %v1414
          %1543 = vst [vmem:[%s295 + $0x78] sm:$0xf] %v1415
          %1544 = vst [vmem:[%s295 + $0x7c] sm:$0xf] %v1416
          %1545 = vst [vmem:[%s295 + $0x80] sm:$0xf] %v1417
          %1546 = vst [vmem:[%s295 + $0x84] sm:$0xf] %v1418
          %1547 = vst [vmem:[%s295 + $0x88] sm:$0xf] %v1419
          %1548 = vst [vmem:[%s295 + $0x8c] sm:$0xf] %v1420
          %1549 = vst [vmem:[%s295 + $0x90] sm:$0xf] %v1421
          %1550 = vst [vmem:[%s295 + $0x94] sm:$0xf] %v1422
          %1551 = vst [vmem:[%s295 + $0x98] sm:$0xf] %v1423
          %1552 = vst [vmem:[%s295 + $0x9c] sm:$0xf] %v1424
          %1553 = vst [vmem:[%s295 + $0xa0] sm:$0xf] %v1425
          %1554 = vst [vmem:[%s295 + $0xa4] sm:$0xf] %v1426
          %1555 = vst [vmem:[%s295 + $0xa8] sm:$0xf] %v1427
          %1556 = vst [vmem:[%s295 + $0xac] sm:$0xf] %v1428
          %1557 = vst [vmem:[%s295 + $0xb0] sm:$0xf] %v1429
          %1558 = vst [vmem:[%s295 + $0xb4] sm:$0xf] %v1430
          %1559 = vst [vmem:[%s295 + $0xb8] sm:$0xf] %v1431
          %1560 = vst [vmem:[%s295 + $0xbc] sm:$0xf] %v1432
          %1561 = vst [vmem:[%s295 + $0xc0] sm:$0xf] %v1433
          %1562 = vst [vmem:[%s295 + $0xc4] sm:$0xf] %v1434
          %1563 = vst [vmem:[%s295 + $0xc8] sm:$0xf] %v1435
          %1564 = vst [vmem:[%s295 + $0xcc] sm:$0xf] %v1436
          %1565 = vst [vmem:[%s295 + $0xd0] sm:$0xf] %v1437
          %1566 = vst [vmem:[%s295 + $0xd4] sm:$0xf] %v1438
          %1567 = vst [vmem:[%s295 + $0xd8] sm:$0xf] %v1439
          %1568 = vst [vmem:[%s295 + $0xdc] sm:$0xf] %v1440
          %1569 = vst [vmem:[%s295 + $0xe0] sm:$0xf] %v1441
          %1570 = vst [vmem:[%s295 + $0xe4] sm:$0xf] %v1442
          %1571 = vst [vmem:[%s295 + $0xe8] sm:$0xf] %v1443
          %1572 = vst [vmem:[%s295 + $0xec] sm:$0xf] %v1444
          %1573 = vst [vmem:[%s295 + $0xf0] sm:$0xf] %v1445
          %1574 = vst [vmem:[%s295 + $0xf4] sm:$0xf] %v1446
          %1575 = vst [vmem:[%s295 + $0xf8] sm:$0xf] %v1447
          %1576 = vst [vmem:[%s295 + $0xfc] sm:$0xf] %v1448
          %v1577 = vadd.f32 %v1193, %v1194
          %v1578 = vadd.f32 %v1577, %v1195
          %v1579 = vadd.f32 %v1578, %v1196
          %v1580 = vadd.f32 %v1579, %v1197
          %v1581 = vadd.f32 %v1580, %v1198
          %v1582 = vadd.f32 %v1581, %v1199
          %v1583 = vadd.f32 %v1582, %v1200
          %v1584 = vadd.f32 %v1583, %v1201
          %v1585 = vadd.f32 %v1584, %v1202
          %v1586 = vadd.f32 %v1585, %v1203
          %v1587 = vadd.f32 %v1586, %v1204
          %v1588 = vadd.f32 %v1587, %v1205
          %v1589 = vadd.f32 %v1588, %v1206
          %v1590 = vadd.f32 %v1589, %v1207
          %v1591 = vadd.f32 %v1590, %v1208
          %v1592 = vadd.f32 %v1591, %v1209
          %v1593 = vadd.f32 %v1592, %v1210
          %v1594 = vadd.f32 %v1593, %v1211
          %v1595 = vadd.f32 %v1594, %v1212
          %v1596 = vadd.f32 %v1595, %v1213
          %v1597 = vadd.f32 %v1596, %v1214
          %v1598 = vadd.f32 %v1597, %v1215
          %v1599 = vadd.f32 %v1598, %v1216
          %v1600 = vadd.f32 %v1599, %v1217
          %v1601 = vadd.f32 %v1600, %v1218
          %v1602 = vadd.f32 %v1601, %v1219
          %v1603 = vadd.f32 %v1602, %v1220
          %v1604 = vadd.f32 %v1603, %v1221
          %v1605 = vadd.f32 %v1604, %v1222
          %v1606 = vadd.f32 %v1605, %v1223
          %v1607 = vadd.f32 %v1606, %v1224
          %v1608 = vadd.f32 %v1607, %v1225
          %v1609 = vadd.f32 %v1608, %v1226
          %v1610 = vadd.f32 %v1609, %v1227
          %v1611 = vadd.f32 %v1610, %v1228
          %v1612 = vadd.f32 %v1611, %v1229
          %v1613 = vadd.f32 %v1612, %v1230
          %v1614 = vadd.f32 %v1613, %v1231
          %v1615 = vadd.f32 %v1614, %v1232
          %v1616 = vadd.f32 %v1615, %v1233
          %v1617 = vadd.f32 %v1616, %v1234
          %v1618 = vadd.f32 %v1617, %v1235
          %v1619 = vadd.f32 %v1618, %v1236
          %v1620 = vadd.f32 %v1619, %v1237
          %v1621 = vadd.f32 %v1620, %v1238
          %v1622 = vadd.f32 %v1621, %v1239
          %v1623 = vadd.f32 %v1622, %v1240
          %v1624 = vadd.f32 %v1623, %v1241
          %v1625 = vadd.f32 %v1624, %v1242
          %v1626 = vadd.f32 %v1625, %v1243
          %v1627 = vadd.f32 %v1626, %v1244
          %v1628 = vadd.f32 %v1627, %v1245
          %v1629 = vadd.f32 %v1628, %v1246
          %v1630 = vadd.f32 %v1629, %v1247
          %v1631 = vadd.f32 %v1630, %v1248
          %v1632 = vadd.f32 %v1631, %v1249
          %v1633 = vadd.f32 %v1632, %v1250
          %v1634 = vadd.f32 %v1633, %v1251
          %v1635 = vadd.f32 %v1634, %v1252
          %v1636 = vadd.f32 %v1635, %v1253
          %v1637 = vadd.f32 %v1636, %v1254
          %v1638 = vadd.f32 %v1637, %v1255
          %v1639 = vadd.f32 %v1638, %v1256
          %v1640 = vrot.slane %v1639, 4
          %v1641 = vadd.f32 %v1639, %v1640
          %v1642 = vrot.slane %v1641, 2
          %v1643 = vadd.f32 %v1641, %v1642
          %v1644 = vrot.slane %v1643, 1
          %v1645 = vadd.f32 %v1643, %v1644
          %1646 = vst [vmem:[%s301] sm:$0x1] %v1645
          %v1647 = vmul.f32 %v1193, %v1193
          %v1648 = vmul.f32 %v1194, %v1194
          %v1649 = vmul.f32 %v1195, %v1195
          %v1650 = vmul.f32 %v1196, %v1196
          %v1651 = vmul.f32 %v1197, %v1197
          %v1652 = vmul.f32 %v1198, %v1198
          %v1653 = vmul.f32 %v1199, %v1199
          %v1654 = vmul.f32 %v1200, %v1200
          %v1655 = vmul.f32 %v1201, %v1201
          %v1656 = vmul.f32 %v1202, %v1202
          %v1657 = vmul.f32 %v1203, %v1203
          %v1658 = vmul.f32 %v1204, %v1204
          %v1659 = vmul.f32 %v1205, %v1205
          %v1660 = vmul.f32 %v1206, %v1206
          %v1661 = vmul.f32 %v1207, %v1207
          %v1662 = vmul.f32 %v1208, %v1208
          %v1663 = vmul.f32 %v1209, %v1209
          %v1664 = vmul.f32 %v1210, %v1210
          %v1665 = vmul.f32 %v1211, %v1211
          %v1666 = vmul.f32 %v1212, %v1212
          %v1667 = vmul.f32 %v1213, %v1213
          %v1668 = vmul.f32 %v1214, %v1214
          %v1669 = vmul.f32 %v1215, %v1215
          %v1670 = vmul.f32 %v1216, %v1216
          %v1671 = vmul.f32 %v1217, %v1217
          %v1672 = vmul.f32 %v1218, %v1218
          %v1673 = vmul.f32 %v1219, %v1219
          %v1674 = vmul.f32 %v1220, %v1220
          %v1675 = vmul.f32 %v1221, %v1221
          %v1676 = vmul.f32 %v1222, %v1222
          %v1677 = vmul.f32 %v1223, %v1223
          %v1678 = vmul.f32 %v1224, %v1224
          %v1679 = vmul.f32 %v1225, %v1225
          %v1680 = vmul.f32 %v1226, %v1226
          %v1681 = vmul.f32 %v1227, %v1227
          %v1682 = vmul.f32 %v1228, %v1228
          %v1683 = vmul.f32 %v1229, %v1229
          %v1684 = vmul.f32 %v1230, %v1230
          %v1685 = vmul.f32 %v1231, %v1231
          %v1686 = vmul.f32 %v1232, %v1232
          %v1687 = vmul.f32 %v1233, %v1233
          %v1688 = vmul.f32 %v1234, %v1234
          %v1689 = vmul.f32 %v1235, %v1235
          %v1690 = vmul.f32 %v1236, %v1236
          %v1691 = vmul.f32 %v1237, %v1237
          %v1692 = vmul.f32 %v1238, %v1238
          %v1693 = vmul.f32 %v1239, %v1239
          %v1694 = vmul.f32 %v1240, %v1240
          %v1695 = vmul.f32 %v1241, %v1241
          %v1696 = vmul.f32 %v1242, %v1242
          %v1697 = vmul.f32 %v1243, %v1243
          %v1698 = vmul.f32 %v1244, %v1244
          %v1699 = vmul.f32 %v1245, %v1245
          %v1700 = vmul.f32 %v1246, %v1246
          %v1701 = vmul.f32 %v1247, %v1247
          %v1702 = vmul.f32 %v1248, %v1248
          %v1703 = vmul.f32 %v1249, %v1249
          %v1704 = vmul.f32 %v1250, %v1250
          %v1705 = vmul.f32 %v1251, %v1251
          %v1706 = vmul.f32 %v1252, %v1252
          %v1707 = vmul.f32 %v1253, %v1253
          %v1708 = vmul.f32 %v1254, %v1254
          %v1709 = vmul.f32 %v1255, %v1255
          %v1710 = vmul.f32 %v1256, %v1256
          %v1711 = vadd.f32 %v1647, %v1648
          %v1712 = vadd.f32 %v1711, %v1649
          %v1713 = vadd.f32 %v1712, %v1650
          %v1714 = vadd.f32 %v1713, %v1651
          %v1715 = vadd.f32 %v1714, %v1652
          %v1716 = vadd.f32 %v1715, %v1653
          %v1717 = vadd.f32 %v1716, %v1654
          %v1718 = vadd.f32 %v1717, %v1655
          %v1719 = vadd.f32 %v1718, %v1656
          %v1720 = vadd.f32 %v1719, %v1657
          %v1721 = vadd.f32 %v1720, %v1658
          %v1722 = vadd.f32 %v1721, %v1659
          %v1723 = vadd.f32 %v1722, %v1660
          %v1724 = vadd.f32 %v1723, %v1661
          %v1725 = vadd.f32 %v1724, %v1662
          %v1726 = vadd.f32 %v1725, %v1663
          %v1727 = vadd.f32 %v1726, %v1664
          %v1728 = vadd.f32 %v1727, %v1665
          %v1729 = vadd.f32 %v1728, %v1666
          %v1730 = vadd.f32 %v1729, %v1667
          %v1731 = vadd.f32 %v1730, %v1668
          %v1732 = vadd.f32 %v1731, %v1669
          %v1733 = vadd.f32 %v1732, %v1670
          %v1734 = vadd.f32 %v1733, %v1671
          %v1735 = vadd.f32 %v1734, %v1672
          %v1736 = vadd.f32 %v1735, %v1673
          %v1737 = vadd.f32 %v1736, %v1674
          %v1738 = vadd.f32 %v1737, %v1675
          %v1739 = vadd.f32 %v1738, %v1676
          %v1740 = vadd.f32 %v1739, %v1677
          %v1741 = vadd.f32 %v1740, %v1678
          %v1742 = vadd.f32 %v1741, %v1679
          %v1743 = vadd.f32 %v1742, %v1680
          %v1744 = vadd.f32 %v1743, %v1681
          %v1745 = vadd.f32 %v1744, %v1682
          %v1746 = vadd.f32 %v1745, %v1683
          %v1747 = vadd.f32 %v1746, %v1684
          %v1748 = vadd.f32 %v1747, %v1685
          %v1749 = vadd.f32 %v1748, %v1686
          %v1750 = vadd.f32 %v1749, %v1687
          %v1751 = vadd.f32 %v1750, %v1688
          %v1752 = vadd.f32 %v1751, %v1689
          %v1753 = vadd.f32 %v1752, %v1690
          %v1754 = vadd.f32 %v1753, %v1691
          %v1755 = vadd.f32 %v1754, %v1692
          %v1756 = vadd.f32 %v1755, %v1693
          %v1757 = vadd.f32 %v1756, %v1694
          %v1758 = vadd.f32 %v1757, %v1695
          %v1759 = vadd.f32 %v1758, %v1696
          %v1760 = vadd.f32 %v1759, %v1697
          %v1761 = vadd.f32 %v1760, %v1698
          %v1762 = vadd.f32 %v1761, %v1699
          %v1763 = vadd.f32 %v1762, %v1700
          %v1764 = vadd.f32 %v1763, %v1701
          %v1765 = vadd.f32 %v1764, %v1702
          %v1766 = vadd.f32 %v1765, %v1703
          %v1767 = vadd.f32 %v1766, %v1704
          %v1768 = vadd.f32 %v1767, %v1705
          %v1769 = vadd.f32 %v1768, %v1706
          %v1770 = vadd.f32 %v1769, %v1707
          %v1771 = vadd.f32 %v1770, %v1708
          %v1772 = vadd.f32 %v1771, %v1709
          %v1773 = vadd.f32 %v1772, %v1710
          %v1774 = vrot.slane %v1773, 4
          %v1775 = vadd.f32 %v1773, %v1774
          %v1776 = vrot.slane %v1775, 2
          %v1777 = vadd.f32 %v1775, %v1776
          %v1778 = vrot.slane %v1777, 1
          %v1779 = vadd.f32 %v1777, %v1778
          %1780 = vst [vmem:[%s307] sm:$0x1] %v1779
        $region44: #{conv_transpose2d_block.1} parent=27 // pred_fallthru
          _
        %s1781 = sand.u32 %s115, 1
        %s1782 = scalar_lea.sflag [#allocation5], %s1781
        %s1783 = sand.u32 %s115, 1
        %s1784 = smul.addr %s1783, 256
        %s1785 = scalar_lea.vmem [#allocation8], %s1784
        %s1786 = sand.u32 %s28, 1
        %s1787 = scalar_lea.sflag [#allocation10], %s1786
        %s1788 = sand.u32 %s143, 1
        %s1789 = scalar_lea.vmem [#allocation9], %s1788
        %s1790 = sand.u32 %s28, 1
        %s1791 = scalar_lea.sflag [#allocation10], %s1790
        %s1792 = sand.u32 %s171, 1
        %s1793 = scalar_lea.vmem [#allocation11], %s1792
        // Predicated region
        $region45: #{conv_transpose2d_block.1} parent=27 // pred_check
          %p1794 = pneg %p125
        $region46: #{conv_transpose2d_block.1} parent=27 // pred_check_branch
          %1796 = sbr.rel (%p1794) target = $region48
        $region47: #{conv_transpose2d_block.1} parent=27 // pred_region
          %s1797 = smul.u32 64, %s34
          %s1799 = ssub.s32 4096, 4096
          %1800 = vsyncadd %s1782, %s1799
          %s1801 = smul.addr %s33, 64
          %s1802 = sadd.s32 %s1797, %s1801
          %s1803 = smul.addr %s1802, 64
          %s1804 = scalar_lea.hbm %s2, %s1803
          %s1805 = sshll.u32 %s1785, 4
          %s1806 = int_to_ptr.vmem [resolvable:$true] %s1805
          %1811 = dma.vmem_to_hbm [thread:$0]  %s1806, 4096, %s1804, %s1782, 64, 64, 4
        $region48: #{conv_transpose2d_block.1} parent=27 // pred_fallthru
          _
        // Predicated region
        $region49: #{conv_transpose2d_block.1} parent=27 // pred_check
          %p1812 = pneg %p153
        $region50: #{conv_transpose2d_block.1} parent=27 // pred_check_branch
          %1814 = sbr.rel (%p1812) target = $region52
        $region51: #{conv_transpose2d_block.1} parent=27 // pred_region
          %s1816 = ssub.s32 16, 16
          %1817 = vsyncadd %s1787, %s1816
          %s1818 = sadd.s32 %s34, %s33
          %s1819 = smul.addr %s1818, 16
          %s1820 = scalar_lea.hbm %s3, %s1819
          %s1822 = sshll.u32 %s1789, 4
          %s1823 = int_to_ptr.vmem [resolvable:$true] %s1822
          %1825 = dma.vmem_to_hbm [thread:$0]  %s1823, 16, %s1820, %s1787
        $region52: #{conv_transpose2d_block.1} parent=27 // pred_fallthru
          _
        // Predicated region
        $region53: #{conv_transpose2d_block.1} parent=27 // pred_check
          %p1826 = pneg %p181
        $region54: #{conv_transpose2d_block.1} parent=27 // pred_check_branch
          %1828 = sbr.rel (%p1826) target = $region56
        $region55: #{conv_transpose2d_block.1} parent=27 // pred_region
          %s1830 = ssub.s32 16, 16
          %1831 = vsyncadd %s1791, %s1830
          %s1832 = sadd.s32 %s34, %s33
          %s1833 = smul.addr %s1832, 16
          %s1834 = scalar_lea.hbm %s4, %s1833
          %s1836 = sshll.u32 %s1793, 4
          %s1837 = int_to_ptr.vmem [resolvable:$true] %s1836
          %1839 = dma.vmem_to_hbm [thread:$0]  %s1837, 16, %s1834, %s1791
        $region56: #{conv_transpose2d_block.1} parent=27 // pred_fallthru
          _
      $region28: #{conv_transpose2d_block.1} parent=5 // pred_fallthru
        _
      %p1840 = scmp.le.s32.totalorder 2, %s23
      // Predicated region
      $region57: #{conv_transpose2d_block.1} parent=5 // pred_check
        %p1841 = pneg %p1840
      $region58: #{conv_transpose2d_block.1} parent=5 // pred_check_branch
        %1843 = sbr.rel (%p1841) target = $region60
      $region59: #{conv_transpose2d_block.1} parent=5 // pred_region
        %s1844 = ssub.s32 %s23, 2
        // Predicated region
        $region61: #{conv_transpose2d_block.1} parent=59 // pred_check
          %p1845 = pneg %p131
        $region62: #{conv_transpose2d_block.1} parent=59 // pred_check_branch
          %1847 = sbr.rel (%p1845) target = $region64
        $region63: #{conv_transpose2d_block.1} parent=59 // pred_region
          %s1848 = sand.u32 %s116, 1
          %s1849 = scalar_lea.sflag [#allocation5], %s1848
          %s1850 = sand.u32 %s116, 1
          %s1851 = smul.addr %s1850, 256
          %s1852 = scalar_lea.vmem [#allocation8], %s1851
          %1853 = dma.done %s1849, 4096
        $region64: #{conv_transpose2d_block.1} parent=59 // pred_fallthru
          _
        // Predicated region
        $region65: #{conv_transpose2d_block.1} parent=59 // pred_check
          %p1854 = pneg %p159
        $region66: #{conv_transpose2d_block.1} parent=59 // pred_check_branch
          %1856 = sbr.rel (%p1854) target = $region68
        $region67: #{conv_transpose2d_block.1} parent=59 // pred_region
          %s1857 = sand.u32 %s29, 1
          %s1858 = scalar_lea.sflag [#allocation10], %s1857
          %s1859 = sand.u32 %s144, 1
          %s1860 = scalar_lea.vmem [#allocation9], %s1859
          %1861 = dma.done %s1858, 16
        $region68: #{conv_transpose2d_block.1} parent=59 // pred_fallthru
          _
        // Predicated region
        $region69: #{conv_transpose2d_block.1} parent=59 // pred_check
          %p1862 = pneg %p187
        $region70: #{conv_transpose2d_block.1} parent=59 // pred_check_branch
          %1864 = sbr.rel (%p1862) target = $region72
        $region71: #{conv_transpose2d_block.1} parent=59 // pred_region
          %s1865 = sand.u32 %s29, 1
          %s1866 = scalar_lea.sflag [#allocation10], %s1865
          %s1867 = sand.u32 %s172, 1
          %s1868 = scalar_lea.vmem [#allocation11], %s1867
          %1869 = dma.done %s1866, 16
        $region72: #{conv_transpose2d_block.1} parent=59 // pred_fallthru
          _
      $region60: #{conv_transpose2d_block.1} parent=5 // pred_fallthru
        _
    $region6: #{conv_transpose2d_block.1} parent=1 // loop_footer
      %s27 = sadd.s32 1, %s23
    $region7: #{conv_transpose2d_block.1} parent=1 // loop_footer_branch
      %22 = sbr.rel target = $region3
    $region8: #{conv_transpose2d_block.1} parent=1 // loop_exit
      _
    %1870 = vsyncpa [#allocation4], 1
    %s1871 = scalar_lea.sflag [#allocation4], 1
    %1872 = vsyncpa %s1871, 1
    %1873 = vsyncpa [#allocation7], 1
    %s1874 = scalar_lea.sflag [#allocation7], 1
    %1875 = vsyncpa %s1874, 1
    %1876 = vsyncpa [#allocation5], 1
    %s1877 = scalar_lea.sflag [#allocation5], 1
    %1878 = vsyncpa %s1877, 1
    %1879 = vsyncpa [#allocation10], 1
    %s1880 = scalar_lea.sflag [#allocation10], 1
    %1881 = vsyncpa %s1880, 1

</llo_original>
